<compile_context>
chip_gen: v7x
topology: tpu7x:2x2x1
jax: 0.10.0
libtpu: 0.0.40
codegen_flags: <defaults>
</compile_context>

<pallas_src>
import jax
import jax.numpy as jnp
import numpy as np
from jax import lax
from jax.experimental import pallas as pl
from jax.experimental.pallas import tpu as pltpu

KSIZE = 3
WINSIZE = float(KSIZE * KSIZE)  # slide_winsize (single-channel mask updater)
EPS = 1e-8


def _fused_double_partial_conv_kernel(
    x_ref, m_ref, s_ref, t_ref, rin_ref, rout_ref,
    bw1_ref, bw2_ref, bias1_ref, bias2_ref,
    out_ref, mout_ref,
):
    # x_ref    : (1, H, W*Cin)        activations, lane-dense (w, ci) flattened
    # m_ref    : (1, H, W)            single-channel mask
    # s_ref    : (3, H, H)            row-shift matrices (dy taps, zero pad baked in)
    # t_ref    : (W, W)               tridiagonal ones (3-tap column sum for mask conv)
    # rin_ref  : (W, W*Cin)           lane replication  (H,W) -> (H, W*Cin)
    # rout_ref : (W, W*Cout)          lane replication  (H,W) -> (H, W*Cout)
    # bw1_ref  : (3, W*Cin,  W*Cout)  column-banded conv1 weights (dx taps + zero pad baked in)
    # bw2_ref  : (3, W*Cout, W*Cout)  column-banded conv2 weights
    # bias1/2  : (1, W*Cout)          bias tiled along w
    # out_ref  : (1, H, W*Cout)       lane-dense output
    # mout_ref : (1, H, W)            final update mask
    x = x_ref[0]                          # (H, W*Cin)
    m = m_ref[0]                          # (H, W)
    sv = s_ref[0] + s_ref[1] + s_ref[2]   # (H, H) tridiagonal ones

    def partial_conv_relu(xm, msk, bw_ref, bias_ref):
        # xm : (H, W*C) masked input slab ; msk : (H, W) current mask
        # 3x3 conv = 3 dense matmuls: rows shifted by S[dy], dx taps folded into BW[dy].
        acc = jnp.dot(jnp.dot(s_ref[0], xm, preferred_element_type=jnp.float32),
                      bw_ref[0], preferred_element_type=jnp.float32)
        acc = acc + jnp.dot(xm, bw_ref[1], preferred_element_type=jnp.float32)  # dy=1: S is I
        acc = acc + jnp.dot(jnp.dot(s_ref[2], xm, preferred_element_type=jnp.float32),
                            bw_ref[2], preferred_element_type=jnp.float32)
        # 3x3 "ones" conv of the mask: rows via Sv, columns via T (both on the MXU).
        msum = jnp.dot(jnp.dot(sv, msk, preferred_element_type=jnp.float32),
                       t_ref[...], preferred_element_type=jnp.float32)          # (H, W)
        ratio = WINSIZE * pl.reciprocal(msum + EPS, approx=True)
        upd = jnp.clip(msum, 0.0, 1.0)
        scale = ratio * upd
        # replicate per-pixel scalars across the channel lanes (MXU, otherwise idle)
        scale_r = jnp.dot(scale, rout_ref[...], preferred_element_type=jnp.float32)
        upd_r = jnp.dot(upd, rout_ref[...], preferred_element_type=jnp.float32)
        out = (acc * scale_r + bias_ref[...]) * upd_r
        return jnp.maximum(out, 0.0), upd, upd_r

    # ---- stage 1 ----
    m_rep = jnp.dot(m, rin_ref[...], preferred_element_type=jnp.float32)  # (H, W*Cin)
    out1, upd1, upd1_r = partial_conv_relu(x * m_rep, m, bw1_ref, bias1_ref)
    # ---- stage 2 (intermediate activation + mask stay on-chip) ----
    out2, upd2, _ = partial_conv_relu(out1 * upd1_r, upd1, bw2_ref, bias2_ref)

    out_ref[0] = out2
    mout_ref[0] = upd2


# ----- constant-matrix construction (host-side, once per shape/params) -----
def _shift_mats(H):
    s = np.zeros((KSIZE, H, H), np.float32)
    for dy in range(KSIZE):
        for h in range(H):
            hp = h + dy - 1
            if 0 <= hp < H:
                s[dy, h, hp] = 1.0
    return s


def _tri_mat(W):
    t = np.zeros((W, W), np.float32)
    for u in range(W):
        for w in range(W):
            if abs(u - w) <= 1:
                t[u, w] = 1.0
    return t


def _rep_mat(W, C):
    r = np.zeros((W, W * C), np.float32)
    for w in range(W):
        r[w, w * C:(w + 1) * C] = 1.0
    return r


def _banded_weights(w_oihw, W):
    # torch layout (Cout, Cin, 3, 3) -> (3, W*Cin, W*Cout) column-banded matrices
    cout, cin, kh, kw = w_oihw.shape
    b = np.zeros((kh, W * cin, W * cout), np.float32)
    for dy in range(kh):
        for dx in range(kw):
            wt = np.asarray(w_oihw[:, :, dy, dx]).T          # (Cin, Cout)
            for w in range(W):
                u = w + dx - 1                               # input column; OOB => zero pad
                if 0 <= u < W:
                    b[dy, u * cin:(u + 1) * cin, w * cout:(w + 1) * cout] = wt
    return b


def _prepare_constants(params, H, W):
    cout, cin = params["w1"].shape[0], params["w1"].shape[1]
    return {
        "S": jnp.asarray(_shift_mats(H)),
        "T": jnp.asarray(_tri_mat(W)),
        "Rin": jnp.asarray(_rep_mat(W, cin)),
        "Rout": jnp.asarray(_rep_mat(W, cout)),
        "B1": jnp.asarray(_banded_weights(np.asarray(params["w1"]), W)),
        "B2": jnp.asarray(_banded_weights(np.asarray(params["w2"]), W)),
        "bias1": jnp.asarray(np.tile(np.asarray(params["b1"]), W)[None, :]),
        "bias2": jnp.asarray(np.tile(np.asarray(params["b2"]), W)[None, :]),
    }


def double_partial_conv(x_nchw, m_nchw, params):
    """Matches DoublePartialConv.forward(x, m) with ReLU activation.  NCHW in/out."""
    N, Cin, H, W = x_nchw.shape
    Cout = params["w1"].shape[0]
    c = _prepare_constants(params, H, W)

    # lane-dense slabs: last dim = W*C (layout plumbing only, done in the wrapper)
    x = jnp.transpose(x_nchw, (0, 2, 3, 1)).reshape(N, H, W * Cin)
    m = m_nchw.reshape(N, H, W)

    out, mout = pl.pallas_call(
        _fused_double_partial_conv_kernel,
        out_shape=(
            jax.ShapeDtypeStruct((N, H, W * Cout), jnp.float32),
            jax.ShapeDtypeStruct((N, H, W), jnp.float32),
        ),
        grid_spec=pltpu.PrefetchScalarGridSpec(
            num_scalar_prefetch=0,
            grid=(N,),
            in_specs=[
                pl.BlockSpec((1, H, W * Cin), lambda n: (n, 0, 0)),
                pl.BlockSpec((1, H, W), lambda n: (n, 0, 0)),
                pl.BlockSpec((KSIZE, H, H), lambda n: (0, 0, 0)),
                pl.BlockSpec((W, W), lambda n: (0, 0)),
                pl.BlockSpec((W, W * Cin), lambda n: (0, 0)),
                pl.BlockSpec((W, W * Cout), lambda n: (0, 0)),
                pl.BlockSpec((KSIZE, W * Cin, W * Cout), lambda n: (0, 0, 0)),
                pl.BlockSpec((KSIZE, W * Cout, W * Cout), lambda n: (0, 0, 0)),
                pl.BlockSpec((1, W * Cout), lambda n: (0, 0)),
                pl.BlockSpec((1, W * Cout), lambda n: (0, 0)),
            ],
            out_specs=[
                pl.BlockSpec((1, H, W * Cout), lambda n: (n, 0, 0)),
                pl.BlockSpec((1, H, W), lambda n: (n, 0, 0)),
            ],
        ),
        compiler_params=pltpu.CompilerParams(
            dimension_semantics=("parallel",)),  # batch axis -> megacore sharding on v7x
    )(x, m, c["S"], c["T"], c["Rin"], c["Rout"], c["B1"], c["B2"], c["bias1"], c["bias2"])

    out_nchw = jnp.transpose(out.reshape(N, H, W, Cout), (0, 3, 1, 2))
    mout_nchw = mout.reshape(N, 1, H, W)
    return out_nchw, mout_nchw


# ----- deterministic parameter init (PyTorch shapes: (Cout, Cin, 3, 3), (Cout,)) -----
def init_params(key, in_channels, out_channels):
    k1, k2, k3, k4 = jax.random.split(key, 4)

    def conv_w(k, cin, cout):
        fan_in = cin * KSIZE * KSIZE
        return jax.random.normal(k, (cout, cin, KSIZE, KSIZE), jnp.float32) / np.sqrt(fan_in)

    def conv_b(k, cin, cout):
        bound = 1.0 / np.sqrt(cin * KSIZE * KSIZE)
        return jax.random.uniform(k, (cout,), jnp.float32, -bound, bound)

    return {
        "w1": conv_w(k1, in_channels, out_channels),
        "b1": conv_b(k2, in_channels, out_channels),
        "w2": conv_w(k3, out_channels, out_channels),
        "b2": conv_b(k4, out_channels, out_channels),
    }


# ----- pure-JAX reference (for correctness check) -----
def _ref_partial_conv_relu(x, m, w_oihw, b):
    w_hwio = jnp.transpose(w_oihw, (2, 3, 1, 0))
    ones_w = jnp.ones((KSIZE, KSIZE, 1, 1), jnp.float32)
    dn_x = lax.conv_dimension_numbers(x.shape, w_hwio.shape, ("NHWC", "HWIO", "NHWC"))
    dn_m = lax.conv_dimension_numbers(m.shape, ones_w.shape, ("NHWC", "HWIO", "NHWC"))
    msum = lax.conv_general_dilated(m, ones_w, (1, 1), "SAME", dimension_numbers=dn_m)
    conv = lax.conv_general_dilated(x * m, w_hwio, (1, 1), "SAME", dimension_numbers=dn_x)
    ratio = WINSIZE / (msum + EPS)
    upd = jnp.clip(msum, 0.0, 1.0)
    ratio = ratio * upd
    out = (conv * ratio + b.reshape(1, 1, 1, -1)) * upd
    return jnp.maximum(out, 0.0), upd


def _ref_double_partial_conv(x_nchw, m_nchw, params):
    x = jnp.transpose(x_nchw, (0, 2, 3, 1))
    m = jnp.transpose(m_nchw, (0, 2, 3, 1))
    x, m = _ref_partial_conv_relu(x, m, params["w1"], params["b1"])
    x, m = _ref_partial_conv_relu(x, m, params["w2"], params["b2"])
    return jnp.transpose(x, (0, 3, 1, 2)), jnp.transpose(m, (0, 3, 1, 2))


if __name__ == "__main__":
    N, Cin, Cout, H, W = 2, 4, 8, 16, 16
    key = jax.random.PRNGKey(0)
    kx, km, kp = jax.random.split(key, 3)

    x = jax.random.normal(kx, (N, Cin, H, W), jnp.float32)                 # NCHW like PyTorch
    m = (jax.random.uniform(km, (N, 1, H, W)) > 0.3).astype(jnp.float32)   # single-channel mask
    params = init_params(kp, Cin, Cout)

    out, mout = double_partial_conv(x, m, params)
    out = jax.block_until_ready(out)
    mout = jax.block_until_ready(mout)

    ref_out, ref_mout = _ref_double_partial_conv(x, m, params)
    assert out.shape == (N, Cout, H, W) and mout.shape == (N, 1, H, W)
    # slightly looser than exact f32: approx-EUP reciprocal + banded-matmul accumulation
    # order differs from XLA's conv; structural bugs would be O(1) off, not 5e-3.
    np.testing.assert_allclose(np.asarray(out), np.asarray(ref_out), rtol=5e-3, atol=5e-3)
    np.testing.assert_allclose(np.asarray(mout), np.asarray(ref_mout), rtol=1e-5, atol=1e-5)

    print("KERNEL_OK")
</pallas_src>

<mosaic_0001>
module attributes {stable_mosaic.version = 11 : i64} {
  func.func @_fused_double_partial_conv_kernel(%arg0: i32, %arg1: memref<1x16x64xf32, #tpu.memory_space<vmem>>, %arg2: memref<1x16x16xf32, #tpu.memory_space<vmem>>, %arg3: memref<3x16x16xf32, #tpu.memory_space<vmem>>, %arg4: memref<16x16xf32, #tpu.memory_space<vmem>>, %arg5: memref<16x64xf32, #tpu.memory_space<vmem>>, %arg6: memref<16x128xf32, #tpu.memory_space<vmem>>, %arg7: memref<3x64x128xf32, #tpu.memory_space<vmem>>, %arg8: memref<3x128x128xf32, #tpu.memory_space<vmem>>, %arg9: memref<1x128xf32, #tpu.memory_space<vmem>>, %arg10: memref<1x128xf32, #tpu.memory_space<vmem>>, %arg11: memref<1x16x128xf32, #tpu.memory_space<vmem>>, %arg12: memref<1x16x16xf32, #tpu.memory_space<vmem>>) attributes {dimension_semantics = [#tpu.dimension_semantics<parallel>], iteration_bounds = array<i64: 2>, scalar_prefetch = 0 : i64, scratch_operands = 0 : i64, tpu.core_type = #tpu.core_type<tc>, window_params = [{transform_indices = @transform_0, window_bounds = array<i64: 1, 16, 64>}, {transform_indices = @transform_1, window_bounds = array<i64: 1, 16, 16>}, {pipeline_mode = #tpu.pipeline_mode<synchronous>, transform_indices = @transform_2, window_bounds = array<i64: 3, 16, 16>}, {pipeline_mode = #tpu.pipeline_mode<synchronous>, transform_indices = @transform_3, window_bounds = array<i64: 16, 16>}, {pipeline_mode = #tpu.pipeline_mode<synchronous>, transform_indices = @transform_4, window_bounds = array<i64: 16, 64>}, {pipeline_mode = #tpu.pipeline_mode<synchronous>, transform_indices = @transform_5, window_bounds = array<i64: 16, 128>}, {pipeline_mode = #tpu.pipeline_mode<synchronous>, transform_indices = @transform_6, window_bounds = array<i64: 3, 64, 128>}, {pipeline_mode = #tpu.pipeline_mode<synchronous>, transform_indices = @transform_7, window_bounds = array<i64: 3, 128, 128>}, {pipeline_mode = #tpu.pipeline_mode<synchronous>, transform_indices = @transform_8, window_bounds = array<i64: 1, 128>}, {pipeline_mode = #tpu.pipeline_mode<synchronous>, transform_indices = @transform_9, window_bounds = array<i64: 1, 128>}, {transform_indices = @transform_10, window_bounds = array<i64: 1, 16, 128>}, {transform_indices = @transform_11, window_bounds = array<i64: 1, 16, 16>}]} {
    %c0 = arith.constant 0 : index
    %c0_0 = arith.constant 0 : index
    %c0_1 = arith.constant 0 : index
    %0 = vector.load %arg1[%c0, %c0_0, %c0_1] : memref<1x16x64xf32, #tpu.memory_space<vmem>>, vector<1x16x64xf32>
    %1 = vector.shape_cast %0 : vector<1x16x64xf32> to vector<16x64xf32>
    %c0_2 = arith.constant 0 : index
    %c0_3 = arith.constant 0 : index
    %c0_4 = arith.constant 0 : index
    %2 = vector.load %arg2[%c0_2, %c0_3, %c0_4] : memref<1x16x16xf32, #tpu.memory_space<vmem>>, vector<1x16x16xf32>
    %3 = vector.shape_cast %2 : vector<1x16x16xf32> to vector<16x16xf32>
    %c0_5 = arith.constant 0 : index
    %c0_6 = arith.constant 0 : index
    %c0_7 = arith.constant 0 : index
    %4 = vector.load %arg3[%c0_5, %c0_6, %c0_7] : memref<3x16x16xf32, #tpu.memory_space<vmem>>, vector<1x16x16xf32>
    %5 = vector.shape_cast %4 : vector<1x16x16xf32> to vector<16x16xf32>
    %c1 = arith.constant 1 : index
    %c0_8 = arith.constant 0 : index
    %c0_9 = arith.constant 0 : index
    %6 = vector.load %arg3[%c1, %c0_8, %c0_9] : memref<3x16x16xf32, #tpu.memory_space<vmem>>, vector<1x16x16xf32>
    %7 = vector.shape_cast %6 : vector<1x16x16xf32> to vector<16x16xf32>
    %8 = arith.addf %5, %7 : vector<16x16xf32>
    %c2 = arith.constant 2 : index
    %c0_10 = arith.constant 0 : index
    %c0_11 = arith.constant 0 : index
    %9 = vector.load %arg3[%c2, %c0_10, %c0_11] : memref<3x16x16xf32, #tpu.memory_space<vmem>>, vector<1x16x16xf32>
    %10 = vector.shape_cast %9 : vector<1x16x16xf32> to vector<16x16xf32>
    %11 = arith.addf %8, %10 : vector<16x16xf32>
    %c0_12 = arith.constant 0 : index
    %c0_13 = arith.constant 0 : index
    %12 = vector.load %arg5[%c0_12, %c0_13] : memref<16x64xf32, #tpu.memory_space<vmem>>, vector<16x64xf32>
    %cst = arith.constant dense<0.000000e+00> : vector<16x64xf32>
    %13 = tpu.matmul %3, %12, %cst {dimension_numbers = #tpu.dot_dimension_numbers<[1], [0], [0], [1], [0, 0, 1, 1], [], []>} : vector<16x16xf32>, vector<16x64xf32>, vector<16x64xf32> -> vector<16x64xf32>
    %14 = arith.mulf %1, %13 : vector<16x64xf32>
    %c0_14 = arith.constant 0 : index
    %c0_15 = arith.constant 0 : index
    %c0_16 = arith.constant 0 : index
    %15 = vector.load %arg3[%c0_14, %c0_15, %c0_16] : memref<3x16x16xf32, #tpu.memory_space<vmem>>, vector<1x16x16xf32>
    %16 = vector.shape_cast %15 : vector<1x16x16xf32> to vector<16x16xf32>
    %cst_17 = arith.constant dense<0.000000e+00> : vector<16x64xf32>
    %17 = tpu.matmul %16, %14, %cst_17 {dimension_numbers = #tpu.dot_dimension_numbers<[1], [0], [0], [1], [0, 0, 1, 1], [], []>} : vector<16x16xf32>, vector<16x64xf32>, vector<16x64xf32> -> vector<16x64xf32>
    %c0_18 = arith.constant 0 : index
    %c0_19 = arith.constant 0 : index
    %c0_20 = arith.constant 0 : index
    %18 = vector.load %arg7[%c0_18, %c0_19, %c0_20] : memref<3x64x128xf32, #tpu.memory_space<vmem>>, vector<1x64x128xf32>
    %19 = vector.shape_cast %18 : vector<1x64x128xf32> to vector<64x128xf32>
    %cst_21 = arith.constant dense<0.000000e+00> : vector<16x128xf32>
    %20 = tpu.matmul %17, %19, %cst_21 {dimension_numbers = #tpu.dot_dimension_numbers<[1], [0], [0], [1], [0, 0, 1, 1], [], []>} : vector<16x64xf32>, vector<64x128xf32>, vector<16x128xf32> -> vector<16x128xf32>
    %c1_22 = arith.constant 1 : index
    %c0_23 = arith.constant 0 : index
    %c0_24 = arith.constant 0 : index
    %21 = vector.load %arg7[%c1_22, %c0_23, %c0_24] : memref<3x64x128xf32, #tpu.memory_space<vmem>>, vector<1x64x128xf32>
    %22 = vector.shape_cast %21 : vector<1x64x128xf32> to vector<64x128xf32>
    %cst_25 = arith.constant dense<0.000000e+00> : vector<16x128xf32>
    %23 = tpu.matmul %14, %22, %cst_25 {dimension_numbers = #tpu.dot_dimension_numbers<[1], [0], [0], [1], [0, 0, 1, 1], [], []>} : vector<16x64xf32>, vector<64x128xf32>, vector<16x128xf32> -> vector<16x128xf32>
    %24 = arith.addf %20, %23 : vector<16x128xf32>
    %c2_26 = arith.constant 2 : index
    %c0_27 = arith.constant 0 : index
    %c0_28 = arith.constant 0 : index
    %25 = vector.load %arg3[%c2_26, %c0_27, %c0_28] : memref<3x16x16xf32, #tpu.memory_space<vmem>>, vector<1x16x16xf32>
    %26 = vector.shape_cast %25 : vector<1x16x16xf32> to vector<16x16xf32>
    %cst_29 = arith.constant dense<0.000000e+00> : vector<16x64xf32>
    %27 = tpu.matmul %26, %14, %cst_29 {dimension_numbers = #tpu.dot_dimension_numbers<[1], [0], [0], [1], [0, 0, 1, 1], [], []>} : vector<16x16xf32>, vector<16x64xf32>, vector<16x64xf32> -> vector<16x64xf32>
    %c2_30 = arith.constant 2 : index
    %c0_31 = arith.constant 0 : index
    %c0_32 = arith.constant 0 : index
    %28 = vector.load %arg7[%c2_30, %c0_31, %c0_32] : memref<3x64x128xf32, #tpu.memory_space<vmem>>, vector<1x64x128xf32>
    %29 = vector.shape_cast %28 : vector<1x64x128xf32> to vector<64x128xf32>
    %cst_33 = arith.constant dense<0.000000e+00> : vector<16x128xf32>
    %30 = tpu.matmul %27, %29, %cst_33 {dimension_numbers = #tpu.dot_dimension_numbers<[1], [0], [0], [1], [0, 0, 1, 1], [], []>} : vector<16x64xf32>, vector<64x128xf32>, vector<16x128xf32> -> vector<16x128xf32>
    %31 = arith.addf %24, %30 : vector<16x128xf32>
    %cst_34 = arith.constant dense<0.000000e+00> : vector<16x16xf32>
    %32 = tpu.matmul %11, %3, %cst_34 {dimension_numbers = #tpu.dot_dimension_numbers<[1], [0], [0], [1], [0, 0, 1, 1], [], []>} : vector<16x16xf32>, vector<16x16xf32>, vector<16x16xf32> -> vector<16x16xf32>
    %c0_35 = arith.constant 0 : index
    %c0_36 = arith.constant 0 : index
    %33 = vector.load %arg4[%c0_35, %c0_36] : memref<16x16xf32, #tpu.memory_space<vmem>>, vector<16x16xf32>
    %cst_37 = arith.constant dense<0.000000e+00> : vector<16x16xf32>
    %34 = tpu.matmul %32, %33, %cst_37 {dimension_numbers = #tpu.dot_dimension_numbers<[1], [0], [0], [1], [0, 0, 1, 1], [], []>} : vector<16x16xf32>, vector<16x16xf32>, vector<16x16xf32> -> vector<16x16xf32>
    %cst_38 = arith.constant 9.99999993E-9 : f32
    %35 = vector.broadcast %cst_38 : f32 to vector<16x16xf32>
    %36 = arith.addf %34, %35 : vector<16x16xf32>
    %37 = tpu.reciprocal %36 {approx = true} : vector<16x16xf32> -> vector<16x16xf32>
    %cst_39 = arith.constant 9.000000e+00 : f32
    %38 = vector.broadcast %cst_39 : f32 to vector<16x16xf32>
    %39 = arith.mulf %38, %37 : vector<16x16xf32>
    %cst_40 = arith.constant 0.000000e+00 : f32
    %cst_41 = arith.constant 1.000000e+00 : f32
    %40 = vector.broadcast %cst_40 : f32 to vector<16x16xf32>
    %41 = arith.maximumf %40, %34 : vector<16x16xf32>
    %42 = vector.broadcast %cst_41 : f32 to vector<16x16xf32>
    %43 = arith.minimumf %42, %41 : vector<16x16xf32>
    %44 = arith.mulf %39, %43 : vector<16x16xf32>
    %c0_42 = arith.constant 0 : index
    %c0_43 = arith.constant 0 : index
    %45 = vector.load %arg6[%c0_42, %c0_43] : memref<16x128xf32, #tpu.memory_space<vmem>>, vector<16x128xf32>
    %cst_44 = arith.constant dense<0.000000e+00> : vector<16x128xf32>
    %46 = tpu.matmul %44, %45, %cst_44 {dimension_numbers = #tpu.dot_dimension_numbers<[1], [0], [0], [1], [0, 0, 1, 1], [], []>} : vector<16x16xf32>, vector<16x128xf32>, vector<16x128xf32> -> vector<16x128xf32>
    %c0_45 = arith.constant 0 : index
    %c0_46 = arith.constant 0 : index
    %47 = vector.load %arg6[%c0_45, %c0_46] : memref<16x128xf32, #tpu.memory_space<vmem>>, vector<16x128xf32>
    %cst_47 = arith.constant dense<0.000000e+00> : vector<16x128xf32>
    %48 = tpu.matmul %43, %47, %cst_47 {dimension_numbers = #tpu.dot_dimension_numbers<[1], [0], [0], [1], [0, 0, 1, 1], [], []>} : vector<16x16xf32>, vector<16x128xf32>, vector<16x128xf32> -> vector<16x128xf32>
    %49 = arith.mulf %31, %46 : vector<16x128xf32>
    %c0_48 = arith.constant 0 : index
    %c0_49 = arith.constant 0 : index
    %50 = vector.load %arg9[%c0_48, %c0_49] : memref<1x128xf32, #tpu.memory_space<vmem>>, vector<1x128xf32>
    %51 = vector.broadcast %50 : vector<1x128xf32> to vector<16x128xf32>
    %52 = arith.addf %49, %51 : vector<16x128xf32>
    %53 = arith.mulf %52, %48 : vector<16x128xf32>
    %cst_50 = arith.constant 0.000000e+00 : f32
    %54 = vector.broadcast %cst_50 : f32 to vector<16x128xf32>
    %55 = arith.maximumf %53, %54 : vector<16x128xf32>
    %56 = arith.mulf %55, %48 : vector<16x128xf32>
    %c0_51 = arith.constant 0 : index
    %c0_52 = arith.constant 0 : index
    %c0_53 = arith.constant 0 : index
    %57 = vector.load %arg3[%c0_51, %c0_52, %c0_53] : memref<3x16x16xf32, #tpu.memory_space<vmem>>, vector<1x16x16xf32>
    %58 = vector.shape_cast %57 : vector<1x16x16xf32> to vector<16x16xf32>
    %cst_54 = arith.constant dense<0.000000e+00> : vector<16x128xf32>
    %59 = tpu.matmul %58, %56, %cst_54 {dimension_numbers = #tpu.dot_dimension_numbers<[1], [0], [0], [1], [0, 0, 1, 1], [], []>} : vector<16x16xf32>, vector<16x128xf32>, vector<16x128xf32> -> vector<16x128xf32>
    %c0_55 = arith.constant 0 : index
    %c0_56 = arith.constant 0 : index
    %c0_57 = arith.constant 0 : index
    %60 = vector.load %arg8[%c0_55, %c0_56, %c0_57] : memref<3x128x128xf32, #tpu.memory_space<vmem>>, vector<1x128x128xf32>
    %61 = vector.shape_cast %60 : vector<1x128x128xf32> to vector<128x128xf32>
    %cst_58 = arith.constant dense<0.000000e+00> : vector<16x128xf32>
    %62 = tpu.matmul %59, %61, %cst_58 {dimension_numbers = #tpu.dot_dimension_numbers<[1], [0], [0], [1], [0, 0, 1, 1], [], []>} : vector<16x128xf32>, vector<128x128xf32>, vector<16x128xf32> -> vector<16x128xf32>
    %c1_59 = arith.constant 1 : index
    %c0_60 = arith.constant 0 : index
    %c0_61 = arith.constant 0 : index
    %63 = vector.load %arg8[%c1_59, %c0_60, %c0_61] : memref<3x128x128xf32, #tpu.memory_space<vmem>>, vector<1x128x128xf32>
    %64 = vector.shape_cast %63 : vector<1x128x128xf32> to vector<128x128xf32>
    %cst_62 = arith.constant dense<0.000000e+00> : vector<16x128xf32>
    %65 = tpu.matmul %56, %64, %cst_62 {dimension_numbers = #tpu.dot_dimension_numbers<[1], [0], [0], [1], [0, 0, 1, 1], [], []>} : vector<16x128xf32>, vector<128x128xf32>, vector<16x128xf32> -> vector<16x128xf32>
    %66 = arith.addf %62, %65 : vector<16x128xf32>
    %c2_63 = arith.constant 2 : index
    %c0_64 = arith.constant 0 : index
    %c0_65 = arith.constant 0 : index
    %67 = vector.load %arg3[%c2_63, %c0_64, %c0_65] : memref<3x16x16xf32, #tpu.memory_space<vmem>>, vector<1x16x16xf32>
    %68 = vector.shape_cast %67 : vector<1x16x16xf32> to vector<16x16xf32>
    %cst_66 = arith.constant dense<0.000000e+00> : vector<16x128xf32>
    %69 = tpu.matmul %68, %56, %cst_66 {dimension_numbers = #tpu.dot_dimension_numbers<[1], [0], [0], [1], [0, 0, 1, 1], [], []>} : vector<16x16xf32>, vector<16x128xf32>, vector<16x128xf32> -> vector<16x128xf32>
    %c2_67 = arith.constant 2 : index
    %c0_68 = arith.constant 0 : index
    %c0_69 = arith.constant 0 : index
    %70 = vector.load %arg8[%c2_67, %c0_68, %c0_69] : memref<3x128x128xf32, #tpu.memory_space<vmem>>, vector<1x128x128xf32>
    %71 = vector.shape_cast %70 : vector<1x128x128xf32> to vector<128x128xf32>
    %cst_70 = arith.constant dense<0.000000e+00> : vector<16x128xf32>
    %72 = tpu.matmul %69, %71, %cst_70 {dimension_numbers = #tpu.dot_dimension_numbers<[1], [0], [0], [1], [0, 0, 1, 1], [], []>} : vector<16x128xf32>, vector<128x128xf32>, vector<16x128xf32> -> vector<16x128xf32>
    %73 = arith.addf %66, %72 : vector<16x128xf32>
    %cst_71 = arith.constant dense<0.000000e+00> : vector<16x16xf32>
    %74 = tpu.matmul %11, %43, %cst_71 {dimension_numbers = #tpu.dot_dimension_numbers<[1], [0], [0], [1], [0, 0, 1, 1], [], []>} : vector<16x16xf32>, vector<16x16xf32>, vector<16x16xf32> -> vector<16x16xf32>
    %c0_72 = arith.constant 0 : index
    %c0_73 = arith.constant 0 : index
    %75 = vector.load %arg4[%c0_72, %c0_73] : memref<16x16xf32, #tpu.memory_space<vmem>>, vector<16x16xf32>
    %cst_74 = arith.constant dense<0.000000e+00> : vector<16x16xf32>
    %76 = tpu.matmul %74, %75, %cst_74 {dimension_numbers = #tpu.dot_dimension_numbers<[1], [0], [0], [1], [0, 0, 1, 1], [], []>} : vector<16x16xf32>, vector<16x16xf32>, vector<16x16xf32> -> vector<16x16xf32>
    %cst_75 = arith.constant 9.99999993E-9 : f32
    %77 = vector.broadcast %cst_75 : f32 to vector<16x16xf32>
    %78 = arith.addf %76, %77 : vector<16x16xf32>
    %79 = tpu.reciprocal %78 {approx = true} : vector<16x16xf32> -> vector<16x16xf32>
    %cst_76 = arith.constant 9.000000e+00 : f32
    %80 = vector.broadcast %cst_76 : f32 to vector<16x16xf32>
    %81 = arith.mulf %80, %79 : vector<16x16xf32>
    %cst_77 = arith.constant 0.000000e+00 : f32
    %cst_78 = arith.constant 1.000000e+00 : f32
    %82 = vector.broadcast %cst_77 : f32 to vector<16x16xf32>
    %83 = arith.maximumf %82, %76 : vector<16x16xf32>
    %84 = vector.broadcast %cst_78 : f32 to vector<16x16xf32>
    %85 = arith.minimumf %84, %83 : vector<16x16xf32>
    %86 = arith.mulf %81, %85 : vector<16x16xf32>
    %c0_79 = arith.constant 0 : index
    %c0_80 = arith.constant 0 : index
    %87 = vector.load %arg6[%c0_79, %c0_80] : memref<16x128xf32, #tpu.memory_space<vmem>>, vector<16x128xf32>
    %cst_81 = arith.constant dense<0.000000e+00> : vector<16x128xf32>
    %88 = tpu.matmul %86, %87, %cst_81 {dimension_numbers = #tpu.dot_dimension_numbers<[1], [0], [0], [1], [0, 0, 1, 1], [], []>} : vector<16x16xf32>, vector<16x128xf32>, vector<16x128xf32> -> vector<16x128xf32>
    %c0_82 = arith.constant 0 : index
    %c0_83 = arith.constant 0 : index
    %89 = vector.load %arg6[%c0_82, %c0_83] : memref<16x128xf32, #tpu.memory_space<vmem>>, vector<16x128xf32>
    %cst_84 = arith.constant dense<0.000000e+00> : vector<16x128xf32>
    %90 = tpu.matmul %85, %89, %cst_84 {dimension_numbers = #tpu.dot_dimension_numbers<[1], [0], [0], [1], [0, 0, 1, 1], [], []>} : vector<16x16xf32>, vector<16x128xf32>, vector<16x128xf32> -> vector<16x128xf32>
    %91 = arith.mulf %73, %88 : vector<16x128xf32>
    %c0_85 = arith.constant 0 : index
    %c0_86 = arith.constant 0 : index
    %92 = vector.load %arg10[%c0_85, %c0_86] : memref<1x128xf32, #tpu.memory_space<vmem>>, vector<1x128xf32>
    %93 = vector.broadcast %92 : vector<1x128xf32> to vector<16x128xf32>
    %94 = arith.addf %91, %93 : vector<16x128xf32>
    %95 = arith.mulf %94, %90 : vector<16x128xf32>
    %cst_87 = arith.constant 0.000000e+00 : f32
    %96 = vector.broadcast %cst_87 : f32 to vector<16x128xf32>
    %97 = arith.maximumf %95, %96 : vector<16x128xf32>
    %c0_88 = arith.constant 0 : index
    %c0_89 = arith.constant 0 : index
    %c0_90 = arith.constant 0 : index
    %98 = vector.load %arg11[%c0_88, %c0_89, %c0_90] : memref<1x16x128xf32, #tpu.memory_space<vmem>>, vector<1x16x128xf32>
    %99 = vector.shape_cast %98 : vector<1x16x128xf32> to vector<16x128xf32>
    %100 = vector.shape_cast %97 : vector<16x128xf32> to vector<1x16x128xf32>
    tpu.vector_store %arg11[%c0_88, %c0_89, %c0_90], %100 {strides = array<i32>} : memref<1x16x128xf32, #tpu.memory_space<vmem>>, vector<1x16x128xf32>,
    %c0_91 = arith.constant 0 : index
    %c0_92 = arith.constant 0 : index
    %c0_93 = arith.constant 0 : index
    %101 = vector.load %arg12[%c0_91, %c0_92, %c0_93] : memref<1x16x16xf32, #tpu.memory_space<vmem>>, vector<1x16x16xf32>
    %102 = vector.shape_cast %101 : vector<1x16x16xf32> to vector<16x16xf32>
    %103 = vector.shape_cast %85 : vector<16x16xf32> to vector<1x16x16xf32>
    tpu.vector_store %arg12[%c0_91, %c0_92, %c0_93], %103 {strides = array<i32>} : memref<1x16x16xf32, #tpu.memory_space<vmem>>, vector<1x16x16xf32>,
    return
  }
  func.func @transform_0(%arg0: i32) -> (i32, i32, i32) {
    %c0_i32 = arith.constant 0 : i32
    %c0_i32_0 = arith.constant 0 : i32
    %c0_i32_1 = arith.constant 0 : i32
    return %arg0, %c0_i32, %c0_i32_0 : i32, i32, i32
  }
  func.func @transform_1(%arg0: i32) -> (i32, i32, i32) {
    %c0_i32 = arith.constant 0 : i32
    %c0_i32_0 = arith.constant 0 : i32
    %c0_i32_1 = arith.constant 0 : i32
    return %arg0, %c0_i32, %c0_i32_0 : i32, i32, i32
  }
  func.func @transform_2(%arg0: i32) -> (i32, i32, i32) {
    %c0_i32 = arith.constant 0 : i32
    %c0_i32_0 = arith.constant 0 : i32
    %c0_i32_1 = arith.constant 0 : i32
    %c0_i32_2 = arith.constant 0 : i32
    return %c0_i32, %c0_i32_0, %c0_i32_1 : i32, i32, i32
  }
  func.func @transform_3(%arg0: i32) -> (i32, i32) {
    %c0_i32 = arith.constant 0 : i32
    %c0_i32_0 = arith.constant 0 : i32
    %c0_i32_1 = arith.constant 0 : i32
    return %c0_i32, %c0_i32_0 : i32, i32
  }
  func.func @transform_4(%arg0: i32) -> (i32, i32) {
    %c0_i32 = arith.constant 0 : i32
    %c0_i32_0 = arith.constant 0 : i32
    %c0_i32_1 = arith.constant 0 : i32
    return %c0_i32, %c0_i32_0 : i32, i32
  }
  func.func @transform_5(%arg0: i32) -> (i32, i32) {
    %c0_i32 = arith.constant 0 : i32
    %c0_i32_0 = arith.constant 0 : i32
    %c0_i32_1 = arith.constant 0 : i32
    return %c0_i32, %c0_i32_0 : i32, i32
  }
  func.func @transform_6(%arg0: i32) -> (i32, i32, i32) {
    %c0_i32 = arith.constant 0 : i32
    %c0_i32_0 = arith.constant 0 : i32
    %c0_i32_1 = arith.constant 0 : i32
    %c0_i32_2 = arith.constant 0 : i32
    return %c0_i32, %c0_i32_0, %c0_i32_1 : i32, i32, i32
  }
  func.func @transform_7(%arg0: i32) -> (i32, i32, i32) {
    %c0_i32 = arith.constant 0 : i32
    %c0_i32_0 = arith.constant 0 : i32
    %c0_i32_1 = arith.constant 0 : i32
    %c0_i32_2 = arith.constant 0 : i32
    return %c0_i32, %c0_i32_0, %c0_i32_1 : i32, i32, i32
  }
  func.func @transform_8(%arg0: i32) -> (i32, i32) {
    %c0_i32 = arith.constant 0 : i32
    %c0_i32_0 = arith.constant 0 : i32
    %c0_i32_1 = arith.constant 0 : i32
    return %c0_i32, %c0_i32_0 : i32, i32
  }
  func.func @transform_9(%arg0: i32) -> (i32, i32) {
    %c0_i32 = arith.constant 0 : i32
    %c0_i32_0 = arith.constant 0 : i32
    %c0_i32_1 = arith.constant 0 : i32
    return %c0_i32, %c0_i32_0 : i32, i32
  }
  func.func @transform_10(%arg0: i32) -> (i32, i32, i32) {
    %c0_i32 = arith.constant 0 : i32
    %c0_i32_0 = arith.constant 0 : i32
    %c0_i32_1 = arith.constant 0 : i32
    return %arg0, %c0_i32, %c0_i32_0 : i32, i32, i32
  }
  func.func @transform_11(%arg0: i32) -> (i32, i32, i32) {
    %c0_i32 = arith.constant 0 : i32
    %c0_i32_0 = arith.constant 0 : i32
    %c0_i32_1 = arith.constant 0 : i32
    return %arg0, %c0_i32, %c0_i32_0 : i32, i32, i32
  }
}

</mosaic_0001>

<llo_original>
// kernel: tpu_custom_call.1
$region0: #{tpu_custom_call.1}
  #allocation0 [shape = 'u32[]', space=smem, size = 0x4, offset = 0x4, fixed_abs, tag = 'smem constant byte address 0x4 - core index']
  #allocation1 [shape = 'u32[144,128]{1,0:T(1,128)}', space=vmem, size = 0x12000, scoped, tag = 'internal scratch']
  %s0 = inlined_call_operand.hbm [shape: f32[2,16,64], index: 0, kind: input, shape index: {}]
  %s1 = inlined_call_operand.hbm [shape: f32[2,16,16], index: 1, kind: input, shape index: {}]
  %s2 = inlined_call_operand.hbm [shape: f32[3,16,16], index: 2, kind: input, shape index: {}]
  %s3 = inlined_call_operand.hbm [shape: f32[16,16], index: 3, kind: input, shape index: {}]
  %s4 = inlined_call_operand.hbm [shape: f32[16,64], index: 4, kind: input, shape index: {}]
  %s5 = inlined_call_operand.vmem [shape: f32[16,128], index: 5, kind: input, shape index: {}]
  %s6 = inlined_call_operand.hbm [shape: f32[3,64,128], index: 6, kind: input, shape index: {}]
  %s7 = inlined_call_operand.hbm [shape: f32[3,128,128], index: 7, kind: input, shape index: {}]
  %s8 = inlined_call_operand.vmem [shape: f32[1,128], index: 8, kind: input, shape index: {}]
  %s9 = inlined_call_operand.vmem [shape: f32[1,128], index: 9, kind: input, shape index: {}]
  %s10 = inlined_call_operand.hbm [shape: f32[2,16,128], index: 10, kind: output, shape index: {0}]
  %s11 = inlined_call_operand.hbm [shape: f32[2,16,16], index: 11, kind: output, shape index: {1}]
  %12 = xla_tuple %s10, %s11
  %s13 = sld [smem:[#allocation0]]
  $region109: #{tpu_custom_call.1} parent=0
    _
  %s15 = ssub.s32 1, %s13
  %s16 = scalar_select 0, %s15, %s13
  $region1: #{tpu_custom_call.1} parent=0
    #allocation2 [shape = 'u8[16384]{0}', space=vmem, size = 0x4000, scoped, tag = 'input window, operand 0']
    #allocation3 [shape = 's32[2]{0}', space=sflag, size = 0x8, scoped, tag = 'scoped memory for tpu_custom_call.1']
    #allocation4 [shape = 's32[2]{0}', space=sflag, size = 0x8, scoped, tag = 'scoped memory for tpu_custom_call.1']
    #allocation5 [shape = 'u8[16384]{0}', space=vmem, size = 0x4000, scoped, tag = 'input window, operand 1']
    #allocation6 [shape = 's32[2]{0}', space=sflag, size = 0x8, scoped, tag = 'scoped memory for tpu_custom_call.1']
    #allocation7 [shape = 'u8[24576]{0}', space=vmem, size = 0x6000, scoped, tag = 'input window, operand 2, single buffered']
    #allocation8 [shape = 'u8[8192]{0}', space=vmem, size = 0x2000, scoped, tag = 'input window, operand 3, single buffered']
    #allocation9 [shape = 's32[1]{0}', space=sflag, size = 0x4, scoped, tag = 'scoped memory for tpu_custom_call.1']
    #allocation10 [shape = 'u8[8192]{0}', space=vmem, size = 0x2000, scoped, tag = 'input window, operand 4, single buffered']
    #allocation11 [shape = 'u8[98304]{0}', space=vmem, size = 0x18000, scoped, tag = 'input window, operand 6, single buffered']
    #allocation12 [shape = 's32[1]{0}', space=sflag, size = 0x4, scoped, tag = 'scoped memory for tpu_custom_call.1']
    #allocation13 [shape = 'u8[196608]{0}', space=vmem, size = 0x30000, scoped, tag = 'input window, operand 7, single buffered']
    #allocation14 [shape = 'u8[16384]{0}', space=vmem, size = 0x4000, scoped, tag = 'output window, operand 0']
    #allocation15 [shape = 'u8[16384]{0}', space=vmem, size = 0x4000, scoped, tag = 'output window, operand 1']
    #allocation16 [shape = 's32[2]{0}', space=sflag, size = 0x8, scoped, tag = 'scoped memory for tpu_custom_call.1']
    %17 = vsyncpa [#allocation3], 0
    %s18 = scalar_lea.sflag [#allocation3], 1
    %19 = vsyncpa %s18, 0
    %20 = vsyncpa [#allocation6], 0
    %s21 = scalar_lea.sflag [#allocation6], 1
    %22 = vsyncpa %s21, 0
    %23 = vsyncpa [#allocation9], 0
    %24 = vsyncpa [#allocation12], 0
    %25 = vsyncpa [#allocation4], 0
    %s26 = scalar_lea.sflag [#allocation4], 1
    %27 = vsyncpa %s26, 0
    %28 = vsyncpa [#allocation16], 0
    %s29 = scalar_lea.sflag [#allocation16], 1
    %30 = vsyncpa %s29, 0
    loop: start=0, step=1, limit=4
    $region2: #{tpu_custom_call.1} parent=1 // loop_pre_header
      _
    $region3: #{tpu_custom_call.1} parent=1 // loop_header
      %s32 = sphi 0, %s36
      %p33 = scmp.ge.s32.totalorder %s32, 4
      %s42 = sphi 0, %s44
      %s45 = sphi 0, %s42
      %s46 = sphi 0, %s45
      %s62 = sphi 0, %s46
      %s68 = sphi 0, %s70
      %s71 = sphi 0, %s68
      %s72 = sphi 0, %s71
      %s88 = sphi 0, %s72
      %s92 = sphi 0, %s92
      %s94 = sphi 0, %s92
      %s95 = sphi 0, %s94
      %s109 = sphi 0, %s95
      %s113 = sphi 0, %s113
      %s115 = sphi 0, %s113
      %s116 = sphi 0, %s115
      %s130 = sphi 0, %s116
      %s134 = sphi 0, %s134
      %s136 = sphi 0, %s134
      %s137 = sphi 0, %s136
      %s151 = sphi 0, %s137
      %s155 = sphi 0, %s155
      %s157 = sphi 0, %s155
      %s158 = sphi 0, %s157
      %s172 = sphi 0, %s158
      %s176 = sphi 0, %s176
      %s178 = sphi 0, %s176
      %s179 = sphi 0, %s178
      %s193 = sphi 0, %s179
      %s197 = sphi 0, %s197
      %s199 = sphi 0, %s197
      %s200 = sphi 0, %s199
      %s214 = sphi 0, %s200
      %s218 = sphi 0, %s218
      %s220 = sphi 0, %s218
      %s221 = sphi 0, %s220
      %s235 = sphi 0, %s221
      %s239 = sphi 0, %s239
      %s241 = sphi 0, %s239
      %s242 = sphi 0, %s241
      %s256 = sphi 0, %s242
      %s262 = sphi 0, %s264
      %s265 = sphi 0, %s262
      %s266 = sphi 0, %s265
      %s282 = sphi 0, %s266
      %s288 = sphi 0, %s290
      %s291 = sphi 0, %s288
      %s292 = sphi 0, %s291
      %s308 = sphi 0, %s292
    $region4: #{tpu_custom_call.1} parent=1 // loop_header_branch
      %35 = sbr.rel (%p33) target = $region8
    $region5: #{tpu_custom_call.1} parent=1 // loop_body
      %s37 = ssub.s32 %s32, 1
      %s38 = ssub.s32 %s32, 2
      %s39 = sadd.s32 %s32, 1
      %s40 = ssub.s32 %s32, %s39
      %p41 = scmp.eq.s32.totalorder %s40, 0
      %s43 = sadd.s32 %s42, 1
      %s44 = scalar_select %p41, %s42, %s43
      %p47 = pneg %p41
      %p48 = scmp.eq.s32.totalorder %s32, 1
      %p49 = por %p47, %p48
      %p50 = scmp.ne.s32.totalorder %s42, %s45
      %p51 = scmp.eq.s32.totalorder %s32, 0
      %p52 = por %p50, %p51
      %p53 = scmp.ne.s32.totalorder %s42, %s45
      %p54 = scmp.eq.s32.totalorder %s37, 1
      %p55 = por %p53, %p54
      %p56 = scmp.ne.s32.totalorder %s45, %s46
      %p57 = scmp.eq.s32.totalorder %s37, 0
      %p58 = por %p56, %p57
      %p59 = scmp.ne.s32.totalorder %s45, %s46
      %p60 = scmp.eq.s32.totalorder %s38, 1
      %p61 = por %p59, %p60
      %p63 = scmp.ne.s32.totalorder %s46, %s62
      %p64 = scmp.eq.s32.totalorder %s38, 0
      %p65 = por %p63, %p64
      %s66 = ssub.s32 %s32, %s39
      %p67 = scmp.eq.s32.totalorder %s66, 0
      %s69 = sadd.s32 %s68, 1
      %s70 = scalar_select %p67, %s68, %s69
      %p73 = pneg %p67
      %p74 = scmp.eq.s32.totalorder %s32, 1
      %p75 = por %p73, %p74
      %p76 = scmp.ne.s32.totalorder %s68, %s71
      %p77 = scmp.eq.s32.totalorder %s32, 0
      %p78 = por %p76, %p77
      %p79 = scmp.ne.s32.totalorder %s68, %s71
      %p80 = scmp.eq.s32.totalorder %s37, 1
      %p81 = por %p79, %p80
      %p82 = scmp.ne.s32.totalorder %s71, %s72
      %p83 = scmp.eq.s32.totalorder %s37, 0
      %p84 = por %p82, %p83
      %p85 = scmp.ne.s32.totalorder %s71, %s72
      %p86 = scmp.eq.s32.totalorder %s38, 1
      %p87 = por %p85, %p86
      %p89 = scmp.ne.s32.totalorder %s72, %s88
      %p90 = scmp.eq.s32.totalorder %s38, 0
      %p91 = por %p89, %p90
      %s93 = sadd.s32 %s92, 1
      %p96 = scmp.eq.s32.totalorder %s32, 1
      %p97 = scmp.ne.s32.totalorder %s92, %s94
      %p98 = scmp.eq.s32.totalorder %s32, 0
      %p99 = por %p97, %p98
      %p100 = scmp.ne.s32.totalorder %s92, %s94
      %p101 = scmp.eq.s32.totalorder %s37, 1
      %p102 = por %p100, %p101
      %p103 = scmp.ne.s32.totalorder %s94, %s95
      %p104 = scmp.eq.s32.totalorder %s37, 0
      %p105 = por %p103, %p104
      %p106 = scmp.ne.s32.totalorder %s94, %s95
      %p107 = scmp.eq.s32.totalorder %s38, 1
      %p108 = por %p106, %p107
      %p110 = scmp.ne.s32.totalorder %s95, %s109
      %p111 = scmp.eq.s32.totalorder %s38, 0
      %p112 = por %p110, %p111
      %s114 = sadd.s32 %s113, 1
      %p117 = scmp.eq.s32.totalorder %s32, 1
      %p118 = scmp.ne.s32.totalorder %s113, %s115
      %p119 = scmp.eq.s32.totalorder %s32, 0
      %p120 = por %p118, %p119
      %p121 = scmp.ne.s32.totalorder %s113, %s115
      %p122 = scmp.eq.s32.totalorder %s37, 1
      %p123 = por %p121, %p122
      %p124 = scmp.ne.s32.totalorder %s115, %s116
      %p125 = scmp.eq.s32.totalorder %s37, 0
      %p126 = por %p124, %p125
      %p127 = scmp.ne.s32.totalorder %s115, %s116
      %p128 = scmp.eq.s32.totalorder %s38, 1
      %p129 = por %p127, %p128
      %p131 = scmp.ne.s32.totalorder %s116, %s130
      %p132 = scmp.eq.s32.totalorder %s38, 0
      %p133 = por %p131, %p132
      %s135 = sadd.s32 %s134, 1
      %p138 = scmp.eq.s32.totalorder %s32, 1
      %p139 = scmp.ne.s32.totalorder %s134, %s136
      %p140 = scmp.eq.s32.totalorder %s32, 0
      %p141 = por %p139, %p140
      %p142 = scmp.ne.s32.totalorder %s134, %s136
      %p143 = scmp.eq.s32.totalorder %s37, 1
      %p144 = por %p142, %p143
      %p145 = scmp.ne.s32.totalorder %s136, %s137
      %p146 = scmp.eq.s32.totalorder %s37, 0
      %p147 = por %p145, %p146
      %p148 = scmp.ne.s32.totalorder %s136, %s137
      %p149 = scmp.eq.s32.totalorder %s38, 1
      %p150 = por %p148, %p149
      %p152 = scmp.ne.s32.totalorder %s137, %s151
      %p153 = scmp.eq.s32.totalorder %s38, 0
      %p154 = por %p152, %p153
      %s156 = sadd.s32 %s155, 1
      %p159 = scmp.eq.s32.totalorder %s32, 1
      %p160 = scmp.ne.s32.totalorder %s155, %s157
      %p161 = scmp.eq.s32.totalorder %s32, 0
      %p162 = por %p160, %p161
      %p163 = scmp.ne.s32.totalorder %s155, %s157
      %p164 = scmp.eq.s32.totalorder %s37, 1
      %p165 = por %p163, %p164
      %p166 = scmp.ne.s32.totalorder %s157, %s158
      %p167 = scmp.eq.s32.totalorder %s37, 0
      %p168 = por %p166, %p167
      %p169 = scmp.ne.s32.totalorder %s157, %s158
      %p170 = scmp.eq.s32.totalorder %s38, 1
      %p171 = por %p169, %p170
      %p173 = scmp.ne.s32.totalorder %s158, %s172
      %p174 = scmp.eq.s32.totalorder %s38, 0
      %p175 = por %p173, %p174
      %s177 = sadd.s32 %s176, 1
      %p180 = scmp.eq.s32.totalorder %s32, 1
      %p181 = scmp.ne.s32.totalorder %s176, %s178
      %p182 = scmp.eq.s32.totalorder %s32, 0
      %p183 = por %p181, %p182
      %p184 = scmp.ne.s32.totalorder %s176, %s178
      %p185 = scmp.eq.s32.totalorder %s37, 1
      %p186 = por %p184, %p185
      %p187 = scmp.ne.s32.totalorder %s178, %s179
      %p188 = scmp.eq.s32.totalorder %s37, 0
      %p189 = por %p187, %p188
      %p190 = scmp.ne.s32.totalorder %s178, %s179
      %p191 = scmp.eq.s32.totalorder %s38, 1
      %p192 = por %p190, %p191
      %p194 = scmp.ne.s32.totalorder %s179, %s193
      %p195 = scmp.eq.s32.totalorder %s38, 0
      %p196 = por %p194, %p195
      %s198 = sadd.s32 %s197, 1
      %p201 = scmp.eq.s32.totalorder %s32, 1
      %p202 = scmp.ne.s32.totalorder %s197, %s199
      %p203 = scmp.eq.s32.totalorder %s32, 0
      %p204 = por %p202, %p203
      %p205 = scmp.ne.s32.totalorder %s197, %s199
      %p206 = scmp.eq.s32.totalorder %s37, 1
      %p207 = por %p205, %p206
      %p208 = scmp.ne.s32.totalorder %s199, %s200
      %p209 = scmp.eq.s32.totalorder %s37, 0
      %p210 = por %p208, %p209
      %p211 = scmp.ne.s32.totalorder %s199, %s200
      %p212 = scmp.eq.s32.totalorder %s38, 1
      %p213 = por %p211, %p212
      %p215 = scmp.ne.s32.totalorder %s200, %s214
      %p216 = scmp.eq.s32.totalorder %s38, 0
      %p217 = por %p215, %p216
      %s219 = sadd.s32 %s218, 1
      %p222 = scmp.eq.s32.totalorder %s32, 1
      %p223 = scmp.ne.s32.totalorder %s218, %s220
      %p224 = scmp.eq.s32.totalorder %s32, 0
      %p225 = por %p223, %p224
      %p226 = scmp.ne.s32.totalorder %s218, %s220
      %p227 = scmp.eq.s32.totalorder %s37, 1
      %p228 = por %p226, %p227
      %p229 = scmp.ne.s32.totalorder %s220, %s221
      %p230 = scmp.eq.s32.totalorder %s37, 0
      %p231 = por %p229, %p230
      %p232 = scmp.ne.s32.totalorder %s220, %s221
      %p233 = scmp.eq.s32.totalorder %s38, 1
      %p234 = por %p232, %p233
      %p236 = scmp.ne.s32.totalorder %s221, %s235
      %p237 = scmp.eq.s32.totalorder %s38, 0
      %p238 = por %p236, %p237
      %s240 = sadd.s32 %s239, 1
      %p243 = scmp.eq.s32.totalorder %s32, 1
      %p244 = scmp.ne.s32.totalorder %s239, %s241
      %p245 = scmp.eq.s32.totalorder %s32, 0
      %p246 = por %p244, %p245
      %p247 = scmp.ne.s32.totalorder %s239, %s241
      %p248 = scmp.eq.s32.totalorder %s37, 1
      %p249 = por %p247, %p248
      %p250 = scmp.ne.s32.totalorder %s241, %s242
      %p251 = scmp.eq.s32.totalorder %s37, 0
      %p252 = por %p250, %p251
      %p253 = scmp.ne.s32.totalorder %s241, %s242
      %p254 = scmp.eq.s32.totalorder %s38, 1
      %p255 = por %p253, %p254
      %p257 = scmp.ne.s32.totalorder %s242, %s256
      %p258 = scmp.eq.s32.totalorder %s38, 0
      %p259 = por %p257, %p258
      %s260 = ssub.s32 %s32, %s39
      %p261 = scmp.eq.s32.totalorder %s260, 0
      %s263 = sadd.s32 %s262, 1
      %s264 = scalar_select %p261, %s262, %s263
      %p267 = pneg %p261
      %p268 = scmp.eq.s32.totalorder %s32, 1
      %p269 = por %p267, %p268
      %p270 = scmp.ne.s32.totalorder %s262, %s265
      %p271 = scmp.eq.s32.totalorder %s32, 0
      %p272 = por %p270, %p271
      %p273 = scmp.ne.s32.totalorder %s262, %s265
      %p274 = scmp.eq.s32.totalorder %s37, 1
      %p275 = por %p273, %p274
      %p276 = scmp.ne.s32.totalorder %s265, %s266
      %p277 = scmp.eq.s32.totalorder %s37, 0
      %p278 = por %p276, %p277
      %p279 = scmp.ne.s32.totalorder %s265, %s266
      %p280 = scmp.eq.s32.totalorder %s38, 1
      %p281 = por %p279, %p280
      %p283 = scmp.ne.s32.totalorder %s266, %s282
      %p284 = scmp.eq.s32.totalorder %s38, 0
      %p285 = por %p283, %p284
      %s286 = ssub.s32 %s32, %s39
      %p287 = scmp.eq.s32.totalorder %s286, 0
      %s289 = sadd.s32 %s288, 1
      %s290 = scalar_select %p287, %s288, %s289
      %p293 = pneg %p287
      %p294 = scmp.eq.s32.totalorder %s32, 1
      %p295 = por %p293, %p294
      %p296 = scmp.ne.s32.totalorder %s288, %s291
      %p297 = scmp.eq.s32.totalorder %s32, 0
      %p298 = por %p296, %p297
      %p299 = scmp.ne.s32.totalorder %s288, %s291
      %p300 = scmp.eq.s32.totalorder %s37, 1
      %p301 = por %p299, %p300
      %p302 = scmp.ne.s32.totalorder %s291, %s292
      %p303 = scmp.eq.s32.totalorder %s37, 0
      %p304 = por %p302, %p303
      %p305 = scmp.ne.s32.totalorder %s291, %s292
      %p306 = scmp.eq.s32.totalorder %s38, 1
      %p307 = por %p305, %p306
      %p309 = scmp.ne.s32.totalorder %s292, %s308
      %p310 = scmp.eq.s32.totalorder %s38, 0
      %p311 = por %p309, %p310
      %p312 = scmp.le.s32.totalorder 1, %s32
      %p313 = scmp.lt.s32.totalorder %s32, 3
      %p314 = pnand %p312, %p313
      %p315 = pneg %p314
      // Predicated region
      $region9: #{tpu_custom_call.1} parent=5 // pred_check
        _
      $region10: #{tpu_custom_call.1} parent=5 // pred_check_branch
        %317 = sbr.rel (%p314) target = $region12
      $region11: #{tpu_custom_call.1} parent=5 // pred_region
        %s318 = ssub.s32 %s32, 1
        // Predicated region
        $region13: #{tpu_custom_call.1} parent=11 // pred_check
          %p319 = pneg %p105
        $region14: #{tpu_custom_call.1} parent=11 // pred_check_branch
          %321 = sbr.rel (%p319) target = $region16
        $region15: #{tpu_custom_call.1} parent=11 // pred_region
          %s323 = ssub.s32 768, 768
          %324 = vsyncadd [#allocation6], %s323
          %s325 = sshll.u32 [#allocation7], 4
          %s326 = int_to_ptr.vmem [resolvable:$true] %s325
          %331 = dma.hbm_to_vmem [thread:$0]  %s2, 768, %s326, [#allocation6], 128, 128, 8
        $region16: #{tpu_custom_call.1} parent=11 // pred_fallthru
          _
        // Predicated region
        $region17: #{tpu_custom_call.1} parent=11 // pred_check
          %p332 = pneg %p126
        $region18: #{tpu_custom_call.1} parent=11 // pred_check_branch
          %334 = sbr.rel (%p332) target = $region20
        $region19: #{tpu_custom_call.1} parent=11 // pred_region
          %s336 = ssub.s32 256, 256
          %337 = vsyncadd [#allocation9], %s336
          %s338 = sshll.u32 [#allocation8], 4
          %s339 = int_to_ptr.vmem [resolvable:$true] %s338
          %344 = dma.hbm_to_vmem [thread:$0]  %s3, 256, %s339, [#allocation9], 128, 128, 8
        $region20: #{tpu_custom_call.1} parent=11 // pred_fallthru
          _
        // Predicated region
        $region21: #{tpu_custom_call.1} parent=11 // pred_check
          %p345 = pneg %p147
        $region22: #{tpu_custom_call.1} parent=11 // pred_check_branch
          %347 = sbr.rel (%p345) target = $region24
        $region23: #{tpu_custom_call.1} parent=11 // pred_region
          %s349 = ssub.s32 256, 256
          %350 = vsyncadd [#allocation9], %s349
          %s351 = sshll.u32 [#allocation10], 4
          %s352 = int_to_ptr.vmem [resolvable:$true] %s351
          %357 = dma.hbm_to_vmem [thread:$0]  %s4, 256, %s352, [#allocation9], 128, 128, 8
        $region24: #{tpu_custom_call.1} parent=11 // pred_fallthru
          _
        // Predicated region
        $region25: #{tpu_custom_call.1} parent=11 // pred_check
          %p358 = pneg %p168
        $region26: #{tpu_custom_call.1} parent=11 // pred_check_branch
          %360 = sbr.rel (%p358) target = $region28
        $region27: #{tpu_custom_call.1} parent=11 // pred_region
          _
        $region28: #{tpu_custom_call.1} parent=11 // pred_fallthru
          _
        // Predicated region
        $region29: #{tpu_custom_call.1} parent=11 // pred_check
          %p361 = pneg %p189
        $region30: #{tpu_custom_call.1} parent=11 // pred_check_branch
          %363 = sbr.rel (%p361) target = $region32
        $region31: #{tpu_custom_call.1} parent=11 // pred_region
          %s365 = ssub.s32 3072, 3072
          %366 = vsyncadd [#allocation12], %s365
          %s367 = sshll.u32 [#allocation11], 4
          %s368 = int_to_ptr.vmem [resolvable:$true] %s367
          %373 = dma.hbm_to_vmem [thread:$0]  %s6, 3072, %s368, [#allocation12], 128, 128, 8
        $region32: #{tpu_custom_call.1} parent=11 // pred_fallthru
          _
        // Predicated region
        $region33: #{tpu_custom_call.1} parent=11 // pred_check
          %p374 = pneg %p210
        $region34: #{tpu_custom_call.1} parent=11 // pred_check_branch
          %376 = sbr.rel (%p374) target = $region36
        $region35: #{tpu_custom_call.1} parent=11 // pred_region
          %s378 = ssub.s32 6144, 6144
          %379 = vsyncadd [#allocation12], %s378
          %s380 = sshll.u32 [#allocation13], 4
          %s381 = int_to_ptr.vmem [resolvable:$true] %s380
          %386 = dma.hbm_to_vmem [thread:$0]  %s7, 6144, %s381, [#allocation12], 128, 128, 8
        $region36: #{tpu_custom_call.1} parent=11 // pred_fallthru
          _
        // Predicated region
        $region37: #{tpu_custom_call.1} parent=11 // pred_check
          %p387 = pneg %p231
        $region38: #{tpu_custom_call.1} parent=11 // pred_check_branch
          %389 = sbr.rel (%p387) target = $region40
        $region39: #{tpu_custom_call.1} parent=11 // pred_region
          _
        $region40: #{tpu_custom_call.1} parent=11 // pred_fallthru
          _
        // Predicated region
        $region41: #{tpu_custom_call.1} parent=11 // pred_check
          %p390 = pneg %p252
        $region42: #{tpu_custom_call.1} parent=11 // pred_check_branch
          %392 = sbr.rel (%p390) target = $region44
        $region43: #{tpu_custom_call.1} parent=11 // pred_region
          _
        $region44: #{tpu_custom_call.1} parent=11 // pred_fallthru
          _
      $region12: #{tpu_custom_call.1} parent=5 // pred_fallthru
        _
      %p393 = scmp.lt.s32.totalorder %s32, 2
      // Predicated region
      $region45: #{tpu_custom_call.1} parent=5 // pred_check
        %p394 = pneg %p393
      $region46: #{tpu_custom_call.1} parent=5 // pred_check_branch
        %396 = sbr.rel (%p394) target = $region48
      $region47: #{tpu_custom_call.1} parent=5 // pred_region
        // Predicated region
        $region49: #{tpu_custom_call.1} parent=47 // pred_check
          %p397 = pneg %p52
        $region50: #{tpu_custom_call.1} parent=47 // pred_check_branch
          %399 = sbr.rel (%p397) target = $region52
        $region51: #{tpu_custom_call.1} parent=47 // pred_region
          %s400 = sand.u32 %s42, 1
          %s401 = scalar_lea.sflag [#allocation3], %s400
          %s402 = sand.u32 %s42, 1
          %s403 = smul.addr %s402, 16
          %s404 = scalar_lea.vmem [#allocation2], %s403
          %s406 = ssub.s32 256, 256
          %407 = vsyncadd %s401, %s406
          %s408 = smul.addr %s32, 2
          %s409 = smul.addr %s408, 128
          %s410 = scalar_lea.hbm %s0, %s409
          %s411 = sshll.u32 %s404, 4
          %s412 = int_to_ptr.vmem [resolvable:$true] %s411
          %417 = dma.hbm_to_vmem [thread:$0]  %s410, 256, %s412, %s401, 128, 128, 8
        $region52: #{tpu_custom_call.1} parent=47 // pred_fallthru
          _
        // Predicated region
        $region53: #{tpu_custom_call.1} parent=47 // pred_check
          %p418 = pneg %p78
        $region54: #{tpu_custom_call.1} parent=47 // pred_check_branch
          %420 = sbr.rel (%p418) target = $region56
        $region55: #{tpu_custom_call.1} parent=47 // pred_region
          %s421 = sand.u32 %s32, 1
          %s422 = scalar_lea.sflag [#allocation6], %s421
          %s423 = sand.u32 %s68, 1
          %s424 = smul.addr %s423, 16
          %s425 = scalar_lea.vmem [#allocation5], %s424
          %s427 = ssub.s32 256, 256
          %428 = vsyncadd %s422, %s427
          %s429 = smul.addr %s32, 2
          %s430 = smul.addr %s429, 128
          %s431 = scalar_lea.hbm %s1, %s430
          %s432 = sshll.u32 %s425, 4
          %s433 = int_to_ptr.vmem [resolvable:$true] %s432
          %438 = dma.hbm_to_vmem [thread:$0]  %s431, 256, %s433, %s422, 128, 128, 8
        $region56: #{tpu_custom_call.1} parent=47 // pred_fallthru
          _
      $region48: #{tpu_custom_call.1} parent=5 // pred_fallthru
        _
      %p439 = scmp.le.s32.totalorder 1, %s32
      %p440 = scmp.lt.s32.totalorder %s32, 3
      %p441 = pnand %p439, %p440
      %p442 = pneg %p441
      // Predicated region
      $region57: #{tpu_custom_call.1} parent=5 // pred_check
        _
      $region58: #{tpu_custom_call.1} parent=5 // pred_check_branch
        %444 = sbr.rel (%p441) target = $region60
      $region59: #{tpu_custom_call.1} parent=5 // pred_region
        %s445 = ssub.s32 %s32, 1
        %s446 = sand.u32 %s45, 1
        %s447 = scalar_lea.sflag [#allocation3], %s446
        %s448 = sand.u32 %s45, 1
        %s449 = smul.addr %s448, 16
        %s450 = scalar_lea.vmem [#allocation2], %s449
        // Predicated region
        $region61: #{tpu_custom_call.1} parent=59 // pred_check
          %p451 = pneg %p58
        $region62: #{tpu_custom_call.1} parent=59 // pred_check_branch
          %453 = sbr.rel (%p451) target = $region64
        $region63: #{tpu_custom_call.1} parent=59 // pred_region
          %454 = dma.done %s447, 256
        $region64: #{tpu_custom_call.1} parent=59 // pred_fallthru
          _
        %s455 = sand.u32 %s37, 1
        %s456 = scalar_lea.sflag [#allocation6], %s455
        %s457 = sand.u32 %s71, 1
        %s458 = smul.addr %s457, 16
        %s459 = scalar_lea.vmem [#allocation5], %s458
        // Predicated region
        $region65: #{tpu_custom_call.1} parent=59 // pred_check
          %p460 = pneg %p84
        $region66: #{tpu_custom_call.1} parent=59 // pred_check_branch
          %462 = sbr.rel (%p460) target = $region68
        $region67: #{tpu_custom_call.1} parent=59 // pred_region
          %463 = dma.done %s456, 256
        $region68: #{tpu_custom_call.1} parent=59 // pred_fallthru
          _
        // Predicated region
        $region69: #{tpu_custom_call.1} parent=59 // pred_check
          %p464 = pneg %p105
        $region70: #{tpu_custom_call.1} parent=59 // pred_check_branch
          %466 = sbr.rel (%p464) target = $region72
        $region71: #{tpu_custom_call.1} parent=59 // pred_region
          %467 = dma.done [#allocation6], 768
        $region72: #{tpu_custom_call.1} parent=59 // pred_fallthru
          _
        // Predicated region
        $region73: #{tpu_custom_call.1} parent=59 // pred_check
          %p468 = pneg %p126
        $region74: #{tpu_custom_call.1} parent=59 // pred_check_branch
          %470 = sbr.rel (%p468) target = $region76
        $region75: #{tpu_custom_call.1} parent=59 // pred_region
          %471 = dma.done [#allocation9], 256
        $region76: #{tpu_custom_call.1} parent=59 // pred_fallthru
          _
        // Predicated region
        $region77: #{tpu_custom_call.1} parent=59 // pred_check
          %p472 = pneg %p147
        $region78: #{tpu_custom_call.1} parent=59 // pred_check_branch
          %474 = sbr.rel (%p472) target = $region80
        $region79: #{tpu_custom_call.1} parent=59 // pred_region
          %475 = dma.done [#allocation9], 256
        $region80: #{tpu_custom_call.1} parent=59 // pred_fallthru
          _
        // Predicated region
        $region81: #{tpu_custom_call.1} parent=59 // pred_check
          %p476 = pneg %p189
        $region82: #{tpu_custom_call.1} parent=59 // pred_check_branch
          %478 = sbr.rel (%p476) target = $region84
        $region83: #{tpu_custom_call.1} parent=59 // pred_region
          %479 = dma.done [#allocation12], 3072
        $region84: #{tpu_custom_call.1} parent=59 // pred_fallthru
          _
        // Predicated region
        $region85: #{tpu_custom_call.1} parent=59 // pred_check
          %p480 = pneg %p210
        $region86: #{tpu_custom_call.1} parent=59 // pred_check_branch
          %482 = sbr.rel (%p480) target = $region88
        $region87: #{tpu_custom_call.1} parent=59 // pred_region
          %483 = dma.done [#allocation12], 6144
        $region88: #{tpu_custom_call.1} parent=59 // pred_fallthru
          _
        %s484 = sand.u32 %s45, 1
        %s485 = scalar_lea.sflag [#allocation3], %s484
        %s486 = sand.u32 %s45, 1
        %s487 = smul.addr %s486, 16
        %s488 = scalar_lea.vmem [#allocation2], %s487
        %p489 = pneg %p58
        %p490 = pneg %p55
        %s491 = sand.u32 %s37, 1
        %s492 = scalar_lea.sflag [#allocation6], %s491
        %s493 = sand.u32 %s71, 1
        %s494 = smul.addr %s493, 16
        %s495 = scalar_lea.vmem [#allocation5], %s494
        %p496 = pneg %p84
        %p497 = pneg %p81
        %p498 = pneg %p105
        %p499 = pneg %p102
        %p500 = pneg %p126
        %p501 = pneg %p123
        %p502 = pneg %p147
        %p503 = pneg %p144
        %p504 = pneg %p168
        %p505 = pneg %p165
        %p506 = pneg %p189
        %p507 = pneg %p186
        %p508 = pneg %p210
        %p509 = pneg %p207
        %p510 = pneg %p231
        %p511 = pneg %p228
        %p512 = pneg %p252
        %p513 = pneg %p249
        %p514 = pneg %p278
        %p515 = pneg %p275
        %s516 = sand.u32 %s265, 1
        %s517 = scalar_lea.sflag [#allocation4], %s516
        %s518 = sand.u32 %s265, 1
        %s519 = smul.addr %s518, 16
        %s520 = scalar_lea.vmem [#allocation14], %s519
        %p521 = pneg %p304
        %p522 = pneg %p301
        %s523 = sand.u32 %s291, 1
        %s524 = scalar_lea.sflag [#allocation16], %s523
        %s525 = sand.u32 %s291, 1
        %s526 = smul.addr %s525, 16
        %s527 = scalar_lea.vmem [#allocation15], %s526
        %v528 = vld [vmem:[%s450] sm:$0xff]
        %v529 = vld [vmem:[%s450 + $0x8] sm:$0xff]
        %v530 = vld [vmem:[%s459] sm:$0xff]
        %v531 = vld [vmem:[%s459 + $0x8] sm:$0xff]
        %v532 = vld [vmem:[#allocation7] sm:$0xff]
        %v533 = vld [vmem:[#allocation7 + $0x8] sm:$0xff]
        %s534 = scalar_lea.vmem [#allocation7], 16
        %v535 = vld [vmem:[%s534] sm:$0xff]
        %v536 = vld [vmem:[%s534 + $0x8] sm:$0xff]
        %v537 = vadd.f32 %v532, %v535
        %v538 = vadd.f32 %v533, %v536
        %s539 = scalar_lea.vmem [#allocation7], 32
        %v540 = vld [vmem:[%s539] sm:$0xff]
        %v541 = vld [vmem:[%s539 + $0x8] sm:$0xff]
        %v542 = vadd.f32 %v537, %v540
        %v543 = vadd.f32 %v538, %v541
        %v544 = vld [vmem:[#allocation10] sm:$0xff]
        %v545 = vld [vmem:[#allocation10 + $0x8] sm:$0xff]
        %vm546 = vcmask 130048
        %v548 = vsel %vm546, %v530, 0
        %v551 = vsel %vm546, %v531, 0
        %553 = vmatprep.subr.mxu0 0.0
        %554 = vmatpush1.msra.mxu0 %v544
        %555 = vmatprep.subr.mxu0 0.0
        %556 = vmatpush1.msra.mxu0 %v545
        %557 = vmatprep.subr.mxu0 0.0
        %558 = vmatpush1.msra.mxu0 0.0
        %559 = vmatprep.subr.mxu0 0.0
        %560 = vmatpush1.msra.mxu0 0.0
        %561 = vmatprep.subr.mxu0 0.0
        %562 = vmatpush1.msra.mxu0 0.0
        %563 = vmatprep.subr.mxu0 0.0
        %564 = vmatpush1.msra.mxu0 0.0
        %565 = vmatprep.subr.mxu0 0.0
        %566 = vmatpush1.msra.mxu0 0.0
        %567 = vmatprep.subr.mxu0 0.0
        %568 = vmatpush1.msra.mxu0 0.0
        %569 = vmatprep.subr.mxu0 0.0
        %570 = vmatpush1.msra.mxu0 0.0
        %571 = vmatprep.subr.mxu0 0.0
        %572 = vmatpush1.msra.mxu0 0.0
        %573 = vmatprep.subr.mxu0 0.0
        %574 = vmatpush1.msra.mxu0 0.0
        %575 = vmatprep.subr.mxu0 0.0
        %576 = vmatpush1.msra.mxu0 0.0
        %577 = vmatprep.subr.mxu0 0.0
        %578 = vmatpush1.msra.mxu0 0.0
        %579 = vmatprep.subr.mxu0 0.0
        %580 = vmatpush1.msra.mxu0 0.0
        %581 = vmatprep.subr.mxu0 0.0
        %582 = vmatpush1.msra.mxu0 0.0
        %583 = vmatprep.subr.mxu0 0.0
        %584 = vmatpush1.msra.mxu0 0.0
        %585 = vmatprep.subr.mxu0 0.0
        %586 = vmatpush1.msra.mxu0 0.0
        %587 = vmatprep.subr.mxu0 0.0
        %588 = vmatpush1.msra.mxu0 0.0
        %589 = vmatprep.subr.mxu0 0.0
        %590 = vmatpush1.msra.mxu0 0.0
        %591 = vmatprep.subr.mxu0 0.0
        %592 = vmatpush1.msra.mxu0 0.0
        %593 = vmatprep.subr.mxu0 0.0
        %594 = vmatpush1.msra.mxu0 0.0
        %595 = vmatprep.subr.mxu0 0.0
        %596 = vmatpush1.msra.mxu0 0.0
        %597 = vmatprep.subr.mxu0 0.0
        %598 = vmatpush1.msra.mxu0 0.0
        %599 = vmatprep.subr.mxu0 0.0
        %600 = vmatpush1.msra.mxu0 0.0
        %601 = vmatprep.subr.mxu0 0.0
        %602 = vmatpush1.msra.mxu0 0.0
        %603 = vmatprep.subr.mxu0 0.0
        %604 = vmatpush1.msra.mxu0 0.0
        %605 = vmatprep.subr.mxu0 0.0
        %606 = vmatpush1.msra.mxu0 0.0
        %607 = vmatprep.subr.mxu0 0.0
        %608 = vmatpush1.msra.mxu0 0.0
        %609 = vmatprep.subr.mxu0 0.0
        %610 = vmatpush1.msra.mxu0 0.0
        %611 = vmatprep.subr.mxu0 0.0
        %612 = vmatpush1.msra.mxu0 0.0
        %613 = vmatprep.subr.mxu0 0.0
        %614 = vmatpush1.msra.mxu0 0.0
        %615 = vmatprep.subr.mxu0 0.0
        %616 = vmatpush1.msra.mxu0 0.0
        %617 = vmatprep.mubr.f32.mxu0 0.0
        %618 = vmatmul.mubr.f32.gmra.mrb[0].mxu0 %v548
        %v619 = vpop.f32.mrb[0].mxu0
        %v620 = vadd.f32 0.0, %v619
        %v621 = vpop.f32.mrb[0].mxu0
        %622 = vmatprep.mubr.f32.mxu0 0.0
        %623 = vmatmul.mubr.f32.gmra.mrb[0].mxu0 %v551
        %v624 = vpop.f32.mrb[0].mxu0
        %v625 = vadd.f32 0.0, %v624
        %v626 = vpop.f32.mrb[0].mxu0
        %627 = vdwg.mxu0
        %v628 = vmul.f32 %v528, %v620
        %v629 = vmul.f32 %v529, %v625
        %v631 = vsel %vm546, %v532, 0
        %v634 = vsel %vm546, %v533, 0
        %636 = vmatprep.subr.mxu0 0.0
        %637 = vmatpush1.msra.mxu0 %v628
        %638 = vmatprep.subr.mxu0 0.0
        %639 = vmatpush1.msra.mxu0 %v629
        %640 = vmatprep.subr.mxu0 0.0
        %641 = vmatpush1.msra.mxu0 0.0
        %642 = vmatprep.subr.mxu0 0.0
        %643 = vmatpush1.msra.mxu0 0.0
        %644 = vmatprep.subr.mxu0 0.0
        %645 = vmatpush1.msra.mxu0 0.0
        %646 = vmatprep.subr.mxu0 0.0
        %647 = vmatpush1.msra.mxu0 0.0
        %648 = vmatprep.subr.mxu0 0.0
        %649 = vmatpush1.msra.mxu0 0.0
        %650 = vmatprep.subr.mxu0 0.0
        %651 = vmatpush1.msra.mxu0 0.0
        %652 = vmatprep.subr.mxu0 0.0
        %653 = vmatpush1.msra.mxu0 0.0
        %654 = vmatprep.subr.mxu0 0.0
        %655 = vmatpush1.msra.mxu0 0.0
        %656 = vmatprep.subr.mxu0 0.0
        %657 = vmatpush1.msra.mxu0 0.0
        %658 = vmatprep.subr.mxu0 0.0
        %659 = vmatpush1.msra.mxu0 0.0
        %660 = vmatprep.subr.mxu0 0.0
        %661 = vmatpush1.msra.mxu0 0.0
        %662 = vmatprep.subr.mxu0 0.0
        %663 = vmatpush1.msra.mxu0 0.0
        %664 = vmatprep.subr.mxu0 0.0
        %665 = vmatpush1.msra.mxu0 0.0
        %666 = vmatprep.subr.mxu0 0.0
        %667 = vmatpush1.msra.mxu0 0.0
        %668 = vmatprep.subr.mxu0 0.0
        %669 = vmatpush1.msra.mxu0 0.0
        %670 = vmatprep.subr.mxu0 0.0
        %671 = vmatpush1.msra.mxu0 0.0
        %672 = vmatprep.subr.mxu0 0.0
        %673 = vmatpush1.msra.mxu0 0.0
        %674 = vmatprep.subr.mxu0 0.0
        %675 = vmatpush1.msra.mxu0 0.0
        %676 = vmatprep.subr.mxu0 0.0
        %677 = vmatpush1.msra.mxu0 0.0
        %678 = vmatprep.subr.mxu0 0.0
        %679 = vmatpush1.msra.mxu0 0.0
        %680 = vmatprep.subr.mxu0 0.0
        %681 = vmatpush1.msra.mxu0 0.0
        %682 = vmatprep.subr.mxu0 0.0
        %683 = vmatpush1.msra.mxu0 0.0
        %684 = vmatprep.subr.mxu0 0.0
        %685 = vmatpush1.msra.mxu0 0.0
        %686 = vmatprep.subr.mxu0 0.0
        %687 = vmatpush1.msra.mxu0 0.0
        %688 = vmatprep.subr.mxu0 0.0
        %689 = vmatpush1.msra.mxu0 0.0
        %690 = vmatprep.subr.mxu0 0.0
        %691 = vmatpush1.msra.mxu0 0.0
        %692 = vmatprep.subr.mxu0 0.0
        %693 = vmatpush1.msra.mxu0 0.0
        %694 = vmatprep.subr.mxu0 0.0
        %695 = vmatpush1.msra.mxu0 0.0
        %696 = vmatprep.subr.mxu0 0.0
        %697 = vmatpush1.msra.mxu0 0.0
        %698 = vmatprep.subr.mxu0 0.0
        %699 = vmatpush1.msra.mxu0 0.0
        %700 = vmatprep.mubr.f32.mxu0 0.0
        %701 = vmatmul.mubr.f32.gmra.mrb[0].mxu0 %v631
        %v702 = vpop.f32.mrb[0].mxu0
        %v703 = vadd.f32 0.0, %v702
        %v704 = vpop.f32.mrb[0].mxu0
        %705 = vmatprep.mubr.f32.mxu0 0.0
        %706 = vmatmul.mubr.f32.gmra.mrb[0].mxu0 %v634
        %v707 = vpop.f32.mrb[0].mxu0
        %v708 = vadd.f32 0.0, %v707
        %v709 = vpop.f32.mrb[0].mxu0
        %710 = vdwg.mxu0
        %v711 = vld [vmem:[#allocation11] sm:$0xff]
        %v712 = vld [vmem:[#allocation11 + $0x8] sm:$0xff]
        %v713 = vld [vmem:[#allocation11 + $0x10] sm:$0xff]
        %v714 = vld [vmem:[#allocation11 + $0x18] sm:$0xff]
        %v715 = vld [vmem:[#allocation11 + $0x20] sm:$0xff]
        %v716 = vld [vmem:[#allocation11 + $0x28] sm:$0xff]
        %v717 = vld [vmem:[#allocation11 + $0x30] sm:$0xff]
        %v718 = vld [vmem:[#allocation11 + $0x38] sm:$0xff]
        %s719 = scalar_lea.vmem [#allocation11], 64
        %v720 = vld [vmem:[%s719] sm:$0xff]
        %v721 = vld [vmem:[%s719 + $0x8] sm:$0xff]
        %v722 = vld [vmem:[%s719 + $0x10] sm:$0xff]
        %v723 = vld [vmem:[%s719 + $0x18] sm:$0xff]
        %v724 = vld [vmem:[%s719 + $0x20] sm:$0xff]
        %v725 = vld [vmem:[%s719 + $0x28] sm:$0xff]
        %v726 = vld [vmem:[%s719 + $0x30] sm:$0xff]
        %v727 = vld [vmem:[%s719 + $0x38] sm:$0xff]
        %vm728 = vcmask 523264
        %v730 = vsel %vm728, %v628, 0
        %v733 = vsel %vm728, %v629, 0
        %735 = vmatprep.subr.mxu0 0.0
        %736 = vmatpush1.msra.mxu0 %v720
        %737 = vmatprep.subr.mxu0 0.0
        %738 = vmatpush1.msra.mxu0 %v721
        %739 = vmatprep.subr.mxu0 0.0
        %740 = vmatpush1.msra.mxu0 %v722
        %741 = vmatprep.subr.mxu0 0.0
        %742 = vmatpush1.msra.mxu0 %v723
        %743 = vmatprep.subr.mxu0 0.0
        %744 = vmatpush1.msra.mxu0 %v724
        %745 = vmatprep.subr.mxu0 0.0
        %746 = vmatpush1.msra.mxu0 %v725
        %747 = vmatprep.subr.mxu0 0.0
        %748 = vmatpush1.msra.mxu0 %v726
        %749 = vmatprep.subr.mxu0 0.0
        %750 = vmatpush1.msra.mxu0 %v727
        %751 = vmatprep.subr.mxu0 0.0
        %752 = vmatpush1.msra.mxu0 0.0
        %753 = vmatprep.subr.mxu0 0.0
        %754 = vmatpush1.msra.mxu0 0.0
        %755 = vmatprep.subr.mxu0 0.0
        %756 = vmatpush1.msra.mxu0 0.0
        %757 = vmatprep.subr.mxu0 0.0
        %758 = vmatpush1.msra.mxu0 0.0
        %759 = vmatprep.subr.mxu0 0.0
        %760 = vmatpush1.msra.mxu0 0.0
        %761 = vmatprep.subr.mxu0 0.0
        %762 = vmatpush1.msra.mxu0 0.0
        %763 = vmatprep.subr.mxu0 0.0
        %764 = vmatpush1.msra.mxu0 0.0
        %765 = vmatprep.subr.mxu0 0.0
        %766 = vmatpush1.msra.mxu0 0.0
        %767 = vmatprep.subr.mxu0 0.0
        %768 = vmatpush1.msra.mxu0 0.0
        %769 = vmatprep.subr.mxu0 0.0
        %770 = vmatpush1.msra.mxu0 0.0
        %771 = vmatprep.subr.mxu0 0.0
        %772 = vmatpush1.msra.mxu0 0.0
        %773 = vmatprep.subr.mxu0 0.0
        %774 = vmatpush1.msra.mxu0 0.0
        %775 = vmatprep.subr.mxu0 0.0
        %776 = vmatpush1.msra.mxu0 0.0
        %777 = vmatprep.subr.mxu0 0.0
        %778 = vmatpush1.msra.mxu0 0.0
        %779 = vmatprep.subr.mxu0 0.0
        %780 = vmatpush1.msra.mxu0 0.0
        %781 = vmatprep.subr.mxu0 0.0
        %782 = vmatpush1.msra.mxu0 0.0
        %783 = vmatprep.subr.mxu0 0.0
        %784 = vmatpush1.msra.mxu0 0.0
        %785 = vmatprep.subr.mxu0 0.0
        %786 = vmatpush1.msra.mxu0 0.0
        %787 = vmatprep.subr.mxu0 0.0
        %788 = vmatpush1.msra.mxu0 0.0
        %789 = vmatprep.subr.mxu0 0.0
        %790 = vmatpush1.msra.mxu0 0.0
        %791 = vmatprep.subr.mxu0 0.0
        %792 = vmatpush1.msra.mxu0 0.0
        %793 = vmatprep.subr.mxu0 0.0
        %794 = vmatpush1.msra.mxu0 0.0
        %795 = vmatprep.subr.mxu0 0.0
        %796 = vmatpush1.msra.mxu0 0.0
        %797 = vmatprep.subr.mxu0 0.0
        %798 = vmatpush1.msra.mxu0 0.0
        %799 = vmatprep.mubr.f32.mxu0 0.0
        %800 = vmatmul.mubr.f32.gmra.mrb[0].mxu0 %v730
        %v801 = vpop.f32.mrb[0].mxu0
        %v802 = vadd.f32 0.0, %v801
        %v803 = vpop.f32.mrb[0].mxu0
        %804 = vmatprep.mubr.f32.mxu0 0.0
        %805 = vmatmul.mubr.f32.gmra.mrb[0].mxu0 %v733
        %v806 = vpop.f32.mrb[0].mxu0
        %v807 = vadd.f32 0.0, %v806
        %v808 = vpop.f32.mrb[0].mxu0
        %809 = vdwg.mxu0
        %v811 = vsel %vm728, %v703, 0
        %v814 = vsel %vm728, %v708, 0
        %816 = vmatprep.subr.mxu0 0.0
        %817 = vmatpush1.msra.mxu0 %v711
        %818 = vmatprep.subr.mxu0 0.0
        %819 = vmatpush1.msra.mxu0 %v712
        %820 = vmatprep.subr.mxu0 0.0
        %821 = vmatpush1.msra.mxu0 %v713
        %822 = vmatprep.subr.mxu0 0.0
        %823 = vmatpush1.msra.mxu0 %v714
        %824 = vmatprep.subr.mxu0 0.0
        %825 = vmatpush1.msra.mxu0 %v715
        %826 = vmatprep.subr.mxu0 0.0
        %827 = vmatpush1.msra.mxu0 %v716
        %828 = vmatprep.subr.mxu0 0.0
        %829 = vmatpush1.msra.mxu0 %v717
        %830 = vmatprep.subr.mxu0 0.0
        %831 = vmatpush1.msra.mxu0 %v718
        %832 = vmatprep.subr.mxu0 0.0
        %833 = vmatpush1.msra.mxu0 0.0
        %834 = vmatprep.subr.mxu0 0.0
        %835 = vmatpush1.msra.mxu0 0.0
        %836 = vmatprep.subr.mxu0 0.0
        %837 = vmatpush1.msra.mxu0 0.0
        %838 = vmatprep.subr.mxu0 0.0
        %839 = vmatpush1.msra.mxu0 0.0
        %840 = vmatprep.subr.mxu0 0.0
        %841 = vmatpush1.msra.mxu0 0.0
        %842 = vmatprep.subr.mxu0 0.0
        %843 = vmatpush1.msra.mxu0 0.0
        %844 = vmatprep.subr.mxu0 0.0
        %845 = vmatpush1.msra.mxu0 0.0
        %846 = vmatprep.subr.mxu0 0.0
        %847 = vmatpush1.msra.mxu0 0.0
        %848 = vmatprep.subr.mxu0 0.0
        %849 = vmatpush1.msra.mxu0 0.0
        %850 = vmatprep.subr.mxu0 0.0
        %851 = vmatpush1.msra.mxu0 0.0
        %852 = vmatprep.subr.mxu0 0.0
        %853 = vmatpush1.msra.mxu0 0.0
        %854 = vmatprep.subr.mxu0 0.0
        %855 = vmatpush1.msra.mxu0 0.0
        %856 = vmatprep.subr.mxu0 0.0
        %857 = vmatpush1.msra.mxu0 0.0
        %858 = vmatprep.subr.mxu0 0.0
        %859 = vmatpush1.msra.mxu0 0.0
        %860 = vmatprep.subr.mxu0 0.0
        %861 = vmatpush1.msra.mxu0 0.0
        %862 = vmatprep.subr.mxu0 0.0
        %863 = vmatpush1.msra.mxu0 0.0
        %864 = vmatprep.subr.mxu0 0.0
        %865 = vmatpush1.msra.mxu0 0.0
        %866 = vmatprep.subr.mxu0 0.0
        %867 = vmatpush1.msra.mxu0 0.0
        %868 = vmatprep.subr.mxu0 0.0
        %869 = vmatpush1.msra.mxu0 0.0
        %870 = vmatprep.subr.mxu0 0.0
        %871 = vmatpush1.msra.mxu0 0.0
        %872 = vmatprep.subr.mxu0 0.0
        %873 = vmatpush1.msra.mxu0 0.0
        %874 = vmatprep.subr.mxu0 0.0
        %875 = vmatpush1.msra.mxu0 0.0
        %876 = vmatprep.subr.mxu0 0.0
        %877 = vmatpush1.msra.mxu0 0.0
        %878 = vmatprep.subr.mxu0 0.0
        %879 = vmatpush1.msra.mxu0 0.0
        %880 = vmatprep.mubr.f32.mxu0 0.0
        %881 = vmatmul.mubr.f32.gmra.mrb[0].mxu0 %v811
        %v882 = vpop.f32.mrb[0].mxu0
        %v883 = vadd.f32 %v802, %v882
        %v884 = vpop.f32.mrb[0].mxu0
        %885 = vmatprep.mubr.f32.mxu0 0.0
        %886 = vmatmul.mubr.f32.gmra.mrb[0].mxu0 %v814
        %v887 = vpop.f32.mrb[0].mxu0
        %v888 = vadd.f32 %v807, %v887
        %v889 = vpop.f32.mrb[0].mxu0
        %890 = vdwg.mxu0
        %v892 = vsel %vm546, %v540, 0
        %v895 = vsel %vm546, %v541, 0
        %897 = vmatprep.subr.mxu0 0.0
        %898 = vmatpush1.msra.mxu0 %v628
        %899 = vmatprep.subr.mxu0 0.0
        %900 = vmatpush1.msra.mxu0 %v629
        %901 = vmatprep.subr.mxu0 0.0
        %902 = vmatpush1.msra.mxu0 0.0
        %903 = vmatprep.subr.mxu0 0.0
        %904 = vmatpush1.msra.mxu0 0.0
        %905 = vmatprep.subr.mxu0 0.0
        %906 = vmatpush1.msra.mxu0 0.0
        %907 = vmatprep.subr.mxu0 0.0
        %908 = vmatpush1.msra.mxu0 0.0
        %909 = vmatprep.subr.mxu0 0.0
        %910 = vmatpush1.msra.mxu0 0.0
        %911 = vmatprep.subr.mxu0 0.0
        %912 = vmatpush1.msra.mxu0 0.0
        %913 = vmatprep.subr.mxu0 0.0
        %914 = vmatpush1.msra.mxu0 0.0
        %915 = vmatprep.subr.mxu0 0.0
        %916 = vmatpush1.msra.mxu0 0.0
        %917 = vmatprep.subr.mxu0 0.0
        %918 = vmatpush1.msra.mxu0 0.0
        %919 = vmatprep.subr.mxu0 0.0
        %920 = vmatpush1.msra.mxu0 0.0
        %921 = vmatprep.subr.mxu0 0.0
        %922 = vmatpush1.msra.mxu0 0.0
        %923 = vmatprep.subr.mxu0 0.0
        %924 = vmatpush1.msra.mxu0 0.0
        %925 = vmatprep.subr.mxu0 0.0
        %926 = vmatpush1.msra.mxu0 0.0
        %927 = vmatprep.subr.mxu0 0.0
        %928 = vmatpush1.msra.mxu0 0.0
        %929 = vmatprep.subr.mxu0 0.0
        %930 = vmatpush1.msra.mxu0 0.0
        %931 = vmatprep.subr.mxu0 0.0
        %932 = vmatpush1.msra.mxu0 0.0
        %933 = vmatprep.subr.mxu0 0.0
        %934 = vmatpush1.msra.mxu0 0.0
        %935 = vmatprep.subr.mxu0 0.0
        %936 = vmatpush1.msra.mxu0 0.0
        %937 = vmatprep.subr.mxu0 0.0
        %938 = vmatpush1.msra.mxu0 0.0
        %939 = vmatprep.subr.mxu0 0.0
        %940 = vmatpush1.msra.mxu0 0.0
        %941 = vmatprep.subr.mxu0 0.0
        %942 = vmatpush1.msra.mxu0 0.0
        %943 = vmatprep.subr.mxu0 0.0
        %944 = vmatpush1.msra.mxu0 0.0
        %945 = vmatprep.subr.mxu0 0.0
        %946 = vmatpush1.msra.mxu0 0.0
        %947 = vmatprep.subr.mxu0 0.0
        %948 = vmatpush1.msra.mxu0 0.0
        %949 = vmatprep.subr.mxu0 0.0
        %950 = vmatpush1.msra.mxu0 0.0
        %951 = vmatprep.subr.mxu0 0.0
        %952 = vmatpush1.msra.mxu0 0.0
        %953 = vmatprep.subr.mxu0 0.0
        %954 = vmatpush1.msra.mxu0 0.0
        %955 = vmatprep.subr.mxu0 0.0
        %956 = vmatpush1.msra.mxu0 0.0
        %957 = vmatprep.subr.mxu0 0.0
        %958 = vmatpush1.msra.mxu0 0.0
        %959 = vmatprep.subr.mxu0 0.0
        %960 = vmatpush1.msra.mxu0 0.0
        %961 = vmatprep.mubr.f32.mxu0 0.0
        %962 = vmatmul.mubr.f32.gmra.mrb[0].mxu0 %v892
        %v963 = vpop.f32.mrb[0].mxu0
        %v964 = vadd.f32 0.0, %v963
        %v965 = vpop.f32.mrb[0].mxu0
        %966 = vmatprep.mubr.f32.mxu0 0.0
        %967 = vmatmul.mubr.f32.gmra.mrb[0].mxu0 %v895
        %v968 = vpop.f32.mrb[0].mxu0
        %v969 = vadd.f32 0.0, %v968
        %v970 = vpop.f32.mrb[0].mxu0
        %971 = vdwg.mxu0
        %s972 = scalar_lea.vmem [#allocation11], 128
        %v973 = vld [vmem:[%s972] sm:$0xff]
        %v974 = vld [vmem:[%s972 + $0x8] sm:$0xff]
        %v975 = vld [vmem:[%s972 + $0x10] sm:$0xff]
        %v976 = vld [vmem:[%s972 + $0x18] sm:$0xff]
        %v977 = vld [vmem:[%s972 + $0x20] sm:$0xff]
        %v978 = vld [vmem:[%s972 + $0x28] sm:$0xff]
        %v979 = vld [vmem:[%s972 + $0x30] sm:$0xff]
        %v980 = vld [vmem:[%s972 + $0x38] sm:$0xff]
        %v982 = vsel %vm728, %v964, 0
        %v985 = vsel %vm728, %v969, 0
        %987 = vmatprep.subr.mxu0 0.0
        %988 = vmatpush1.msra.mxu0 %v973
        %989 = vmatprep.subr.mxu0 0.0
        %990 = vmatpush1.msra.mxu0 %v974
        %991 = vmatprep.subr.mxu0 0.0
        %992 = vmatpush1.msra.mxu0 %v975
        %993 = vmatprep.subr.mxu0 0.0
        %994 = vmatpush1.msra.mxu0 %v976
        %995 = vmatprep.subr.mxu0 0.0
        %996 = vmatpush1.msra.mxu0 %v977
        %997 = vmatprep.subr.mxu0 0.0
        %998 = vmatpush1.msra.mxu0 %v978
        %999 = vmatprep.subr.mxu0 0.0
        %1000 = vmatpush1.msra.mxu0 %v979
        %1001 = vmatprep.subr.mxu0 0.0
        %1002 = vmatpush1.msra.mxu0 %v980
        %1003 = vmatprep.subr.mxu0 0.0
        %1004 = vmatpush1.msra.mxu0 0.0
        %1005 = vmatprep.subr.mxu0 0.0
        %1006 = vmatpush1.msra.mxu0 0.0
        %1007 = vmatprep.subr.mxu0 0.0
        %1008 = vmatpush1.msra.mxu0 0.0
        %1009 = vmatprep.subr.mxu0 0.0
        %1010 = vmatpush1.msra.mxu0 0.0
        %1011 = vmatprep.subr.mxu0 0.0
        %1012 = vmatpush1.msra.mxu0 0.0
        %1013 = vmatprep.subr.mxu0 0.0
        %1014 = vmatpush1.msra.mxu0 0.0
        %1015 = vmatprep.subr.mxu0 0.0
        %1016 = vmatpush1.msra.mxu0 0.0
        %1017 = vmatprep.subr.mxu0 0.0
        %1018 = vmatpush1.msra.mxu0 0.0
        %1019 = vmatprep.subr.mxu0 0.0
        %1020 = vmatpush1.msra.mxu0 0.0
        %1021 = vmatprep.subr.mxu0 0.0
        %1022 = vmatpush1.msra.mxu0 0.0
        %1023 = vmatprep.subr.mxu0 0.0
        %1024 = vmatpush1.msra.mxu0 0.0
        %1025 = vmatprep.subr.mxu0 0.0
        %1026 = vmatpush1.msra.mxu0 0.0
        %1027 = vmatprep.subr.mxu0 0.0
        %1028 = vmatpush1.msra.mxu0 0.0
        %1029 = vmatprep.subr.mxu0 0.0
        %1030 = vmatpush1.msra.mxu0 0.0
        %1031 = vmatprep.subr.mxu0 0.0
        %1032 = vmatpush1.msra.mxu0 0.0
        %1033 = vmatprep.subr.mxu0 0.0
        %1034 = vmatpush1.msra.mxu0 0.0
        %1035 = vmatprep.subr.mxu0 0.0
        %1036 = vmatpush1.msra.mxu0 0.0
        %1037 = vmatprep.subr.mxu0 0.0
        %1038 = vmatpush1.msra.mxu0 0.0
        %1039 = vmatprep.subr.mxu0 0.0
        %1040 = vmatpush1.msra.mxu0 0.0
        %1041 = vmatprep.subr.mxu0 0.0
        %1042 = vmatpush1.msra.mxu0 0.0
        %1043 = vmatprep.subr.mxu0 0.0
        %1044 = vmatpush1.msra.mxu0 0.0
        %1045 = vmatprep.subr.mxu0 0.0
        %1046 = vmatpush1.msra.mxu0 0.0
        %1047 = vmatprep.subr.mxu0 0.0
        %1048 = vmatpush1.msra.mxu0 0.0
        %1049 = vmatprep.subr.mxu0 0.0
        %1050 = vmatpush1.msra.mxu0 0.0
        %1051 = vmatprep.mubr.f32.mxu0 0.0
        %1052 = vmatmul.mubr.f32.gmra.mrb[0].mxu0 %v982
        %v1053 = vpop.f32.mrb[0].mxu0
        %v1054 = vadd.f32 0.0, %v1053
        %v1055 = vpop.f32.mrb[0].mxu0
        %1056 = vmatprep.mubr.f32.mxu0 0.0
        %1057 = vmatmul.mubr.f32.gmra.mrb[0].mxu0 %v985
        %v1058 = vpop.f32.mrb[0].mxu0
        %v1059 = vadd.f32 0.0, %v1058
        %v1060 = vpop.f32.mrb[0].mxu0
        %1061 = vdwg.mxu0
        %v1062 = vadd.f32 %v883, %v1054
        %v1063 = vadd.f32 %v888, %v1059
        %v1065 = vsel %vm546, %v542, 0
        %v1068 = vsel %vm546, %v543, 0
        %1070 = vmatprep.subr.mxu0 0.0
        %1071 = vmatpush1.msra.mxu0 %v530
        %1072 = vmatprep.subr.mxu0 0.0
        %1073 = vmatpush1.msra.mxu0 %v531
        %1074 = vmatprep.subr.mxu0 0.0
        %1075 = vmatpush1.msra.mxu0 0.0
        %1076 = vmatprep.subr.mxu0 0.0
        %1077 = vmatpush1.msra.mxu0 0.0
        %1078 = vmatprep.subr.mxu0 0.0
        %1079 = vmatpush1.msra.mxu0 0.0
        %1080 = vmatprep.subr.mxu0 0.0
        %1081 = vmatpush1.msra.mxu0 0.0
        %1082 = vmatprep.subr.mxu0 0.0
        %1083 = vmatpush1.msra.mxu0 0.0
        %1084 = vmatprep.subr.mxu0 0.0
        %1085 = vmatpush1.msra.mxu0 0.0
        %1086 = vmatprep.subr.mxu0 0.0
        %1087 = vmatpush1.msra.mxu0 0.0
        %1088 = vmatprep.subr.mxu0 0.0
        %1089 = vmatpush1.msra.mxu0 0.0
        %1090 = vmatprep.subr.mxu0 0.0
        %1091 = vmatpush1.msra.mxu0 0.0
        %1092 = vmatprep.subr.mxu0 0.0
        %1093 = vmatpush1.msra.mxu0 0.0
        %1094 = vmatprep.subr.mxu0 0.0
        %1095 = vmatpush1.msra.mxu0 0.0
        %1096 = vmatprep.subr.mxu0 0.0
        %1097 = vmatpush1.msra.mxu0 0.0
        %1098 = vmatprep.subr.mxu0 0.0
        %1099 = vmatpush1.msra.mxu0 0.0
        %1100 = vmatprep.subr.mxu0 0.0
        %1101 = vmatpush1.msra.mxu0 0.0
        %1102 = vmatprep.subr.mxu0 0.0
        %1103 = vmatpush1.msra.mxu0 0.0
        %1104 = vmatprep.subr.mxu0 0.0
        %1105 = vmatpush1.msra.mxu0 0.0
        %1106 = vmatprep.subr.mxu0 0.0
        %1107 = vmatpush1.msra.mxu0 0.0
        %1108 = vmatprep.subr.mxu0 0.0
        %1109 = vmatpush1.msra.mxu0 0.0
        %1110 = vmatprep.subr.mxu0 0.0
        %1111 = vmatpush1.msra.mxu0 0.0
        %1112 = vmatprep.subr.mxu0 0.0
        %1113 = vmatpush1.msra.mxu0 0.0
        %1114 = vmatprep.subr.mxu0 0.0
        %1115 = vmatpush1.msra.mxu0 0.0
        %1116 = vmatprep.subr.mxu0 0.0
        %1117 = vmatpush1.msra.mxu0 0.0
        %1118 = vmatprep.subr.mxu0 0.0
        %1119 = vmatpush1.msra.mxu0 0.0
        %1120 = vmatprep.subr.mxu0 0.0
        %1121 = vmatpush1.msra.mxu0 0.0
        %1122 = vmatprep.subr.mxu0 0.0
        %1123 = vmatpush1.msra.mxu0 0.0
        %1124 = vmatprep.subr.mxu0 0.0
        %1125 = vmatpush1.msra.mxu0 0.0
        %1126 = vmatprep.subr.mxu0 0.0
        %1127 = vmatpush1.msra.mxu0 0.0
        %1128 = vmatprep.subr.mxu0 0.0
        %1129 = vmatpush1.msra.mxu0 0.0
        %1130 = vmatprep.subr.mxu0 0.0
        %1131 = vmatpush1.msra.mxu0 0.0
        %1132 = vmatprep.subr.mxu0 0.0
        %1133 = vmatpush1.msra.mxu0 0.0
        %1134 = vmatprep.mubr.f32.mxu0 0.0
        %1135 = vmatmul.mubr.f32.gmra.mrb[0].mxu0 %v1065
        %v1136 = vpop.f32.mrb[0].mxu0
        %v1137 = vadd.f32 0.0, %v1136
        %v1138 = vpop.f32.mrb[0].mxu0
        %1139 = vmatprep.mubr.f32.mxu0 0.0
        %1140 = vmatmul.mubr.f32.gmra.mrb[0].mxu0 %v1068
        %v1141 = vpop.f32.mrb[0].mxu0
        %v1142 = vadd.f32 0.0, %v1141
        %v1143 = vpop.f32.mrb[0].mxu0
        %1144 = vdwg.mxu0
        %v1145 = vld [vmem:[#allocation8] sm:$0xff]
        %v1146 = vld [vmem:[#allocation8 + $0x8] sm:$0xff]
        %v1148 = vsel %vm546, %v1137, 0
        %v1151 = vsel %vm546, %v1142, 0
        %1153 = vmatprep.subr.mxu0 0.0
        %1154 = vmatpush1.msra.mxu0 %v1145
        %1155 = vmatprep.subr.mxu0 0.0
        %1156 = vmatpush1.msra.mxu0 %v1146
        %1157 = vmatprep.subr.mxu0 0.0
        %1158 = vmatpush1.msra.mxu0 0.0
        %1159 = vmatprep.subr.mxu0 0.0
        %1160 = vmatpush1.msra.mxu0 0.0
        %1161 = vmatprep.subr.mxu0 0.0
        %1162 = vmatpush1.msra.mxu0 0.0
        %1163 = vmatprep.subr.mxu0 0.0
        %1164 = vmatpush1.msra.mxu0 0.0
        %1165 = vmatprep.subr.mxu0 0.0
        %1166 = vmatpush1.msra.mxu0 0.0
        %1167 = vmatprep.subr.mxu0 0.0
        %1168 = vmatpush1.msra.mxu0 0.0
        %1169 = vmatprep.subr.mxu0 0.0
        %1170 = vmatpush1.msra.mxu0 0.0
        %1171 = vmatprep.subr.mxu0 0.0
        %1172 = vmatpush1.msra.mxu0 0.0
        %1173 = vmatprep.subr.mxu0 0.0
        %1174 = vmatpush1.msra.mxu0 0.0
        %1175 = vmatprep.subr.mxu0 0.0
        %1176 = vmatpush1.msra.mxu0 0.0
        %1177 = vmatprep.subr.mxu0 0.0
        %1178 = vmatpush1.msra.mxu0 0.0
        %1179 = vmatprep.subr.mxu0 0.0
        %1180 = vmatpush1.msra.mxu0 0.0
        %1181 = vmatprep.subr.mxu0 0.0
        %1182 = vmatpush1.msra.mxu0 0.0
        %1183 = vmatprep.subr.mxu0 0.0
        %1184 = vmatpush1.msra.mxu0 0.0
        %1185 = vmatprep.subr.mxu0 0.0
        %1186 = vmatpush1.msra.mxu0 0.0
        %1187 = vmatprep.subr.mxu0 0.0
        %1188 = vmatpush1.msra.mxu0 0.0
        %1189 = vmatprep.subr.mxu0 0.0
        %1190 = vmatpush1.msra.mxu0 0.0
        %1191 = vmatprep.subr.mxu0 0.0
        %1192 = vmatpush1.msra.mxu0 0.0
        %1193 = vmatprep.subr.mxu0 0.0
        %1194 = vmatpush1.msra.mxu0 0.0
        %1195 = vmatprep.subr.mxu0 0.0
        %1196 = vmatpush1.msra.mxu0 0.0
        %1197 = vmatprep.subr.mxu0 0.0
        %1198 = vmatpush1.msra.mxu0 0.0
        %1199 = vmatprep.subr.mxu0 0.0
        %1200 = vmatpush1.msra.mxu0 0.0
        %1201 = vmatprep.subr.mxu0 0.0
        %1202 = vmatpush1.msra.mxu0 0.0
        %1203 = vmatprep.subr.mxu0 0.0
        %1204 = vmatpush1.msra.mxu0 0.0
        %1205 = vmatprep.subr.mxu0 0.0
        %1206 = vmatpush1.msra.mxu0 0.0
        %1207 = vmatprep.subr.mxu0 0.0
        %1208 = vmatpush1.msra.mxu0 0.0
        %1209 = vmatprep.subr.mxu0 0.0
        %1210 = vmatpush1.msra.mxu0 0.0
        %1211 = vmatprep.subr.mxu0 0.0
        %1212 = vmatpush1.msra.mxu0 0.0
        %1213 = vmatprep.subr.mxu0 0.0
        %1214 = vmatpush1.msra.mxu0 0.0
        %1215 = vmatprep.subr.mxu0 0.0
        %1216 = vmatpush1.msra.mxu0 0.0
        %1217 = vmatprep.mubr.f32.mxu0 0.0
        %1218 = vmatmul.mubr.f32.gmra.mrb[0].mxu0 %v1148
        %v1219 = vpop.f32.mrb[0].mxu0
        %v1220 = vadd.f32 0.0, %v1219
        %v1221 = vpop.f32.mrb[0].mxu0
        %1222 = vmatprep.mubr.f32.mxu0 0.0
        %1223 = vmatmul.mubr.f32.gmra.mrb[0].mxu0 %v1151
        %v1224 = vpop.f32.mrb[0].mxu0
        %v1225 = vadd.f32 0.0, %v1224
        %v1226 = vpop.f32.mrb[0].mxu0
        %1227 = vdwg.mxu0
        %v1228 = vadd.f32 %v1220, 1e-08
        %v1229 = vadd.f32 %v1225, 1e-08
        %v1230 = vrcp.pop %v1228
        %v1231 = vrcp.pop %v1229
        %v1232 = vmul.f32 %v1230, 9.0
        %v1233 = vmul.f32 %v1231, 9.0
        %v1234 = vmax.f32 %v1220, 0.0
        %v1235 = vmax.f32 %v1225, 0.0
        %v1236 = vmin.f32 %v1234, 1.0
        %v1237 = vmin.f32 %v1235, 1.0
        %v1238 = vmul.f32 %v1232, %v1236
        %v1239 = vmul.f32 %v1233, %v1237
        %v1240 = vld [vmem:[%s5] sm:$0xff]
        %v1241 = vld [vmem:[%s5 + $0x8] sm:$0xff]
        %v1243 = vsel %vm546, %v1238, 0
        %v1246 = vsel %vm546, %v1239, 0
        %1248 = vmatprep.subr.mxu0 0.0
        %1249 = vmatpush1.msra.mxu0 %v1240
        %1250 = vmatprep.subr.mxu0 0.0
        %1251 = vmatpush1.msra.mxu0 %v1241
        %1252 = vmatprep.subr.mxu0 0.0
        %1253 = vmatpush1.msra.mxu0 0.0
        %1254 = vmatprep.subr.mxu0 0.0
        %1255 = vmatpush1.msra.mxu0 0.0
        %1256 = vmatprep.subr.mxu0 0.0
        %1257 = vmatpush1.msra.mxu0 0.0
        %1258 = vmatprep.subr.mxu0 0.0
        %1259 = vmatpush1.msra.mxu0 0.0
        %1260 = vmatprep.subr.mxu0 0.0
        %1261 = vmatpush1.msra.mxu0 0.0
        %1262 = vmatprep.subr.mxu0 0.0
        %1263 = vmatpush1.msra.mxu0 0.0
        %1264 = vmatprep.subr.mxu0 0.0
        %1265 = vmatpush1.msra.mxu0 0.0
        %1266 = vmatprep.subr.mxu0 0.0
        %1267 = vmatpush1.msra.mxu0 0.0
        %1268 = vmatprep.subr.mxu0 0.0
        %1269 = vmatpush1.msra.mxu0 0.0
        %1270 = vmatprep.subr.mxu0 0.0
        %1271 = vmatpush1.msra.mxu0 0.0
        %1272 = vmatprep.subr.mxu0 0.0
        %1273 = vmatpush1.msra.mxu0 0.0
        %1274 = vmatprep.subr.mxu0 0.0
        %1275 = vmatpush1.msra.mxu0 0.0
        %1276 = vmatprep.subr.mxu0 0.0
        %1277 = vmatpush1.msra.mxu0 0.0
        %1278 = vmatprep.subr.mxu0 0.0
        %1279 = vmatpush1.msra.mxu0 0.0
        %1280 = vmatprep.subr.mxu0 0.0
        %1281 = vmatpush1.msra.mxu0 0.0
        %1282 = vmatprep.subr.mxu0 0.0
        %1283 = vmatpush1.msra.mxu0 0.0
        %1284 = vmatprep.subr.mxu0 0.0
        %1285 = vmatpush1.msra.mxu0 0.0
        %1286 = vmatprep.subr.mxu0 0.0
        %1287 = vmatpush1.msra.mxu0 0.0
        %1288 = vmatprep.subr.mxu0 0.0
        %1289 = vmatpush1.msra.mxu0 0.0
        %1290 = vmatprep.subr.mxu0 0.0
        %1291 = vmatpush1.msra.mxu0 0.0
        %1292 = vmatprep.subr.mxu0 0.0
        %1293 = vmatpush1.msra.mxu0 0.0
        %1294 = vmatprep.subr.mxu0 0.0
        %1295 = vmatpush1.msra.mxu0 0.0
        %1296 = vmatprep.subr.mxu0 0.0
        %1297 = vmatpush1.msra.mxu0 0.0
        %1298 = vmatprep.subr.mxu0 0.0
        %1299 = vmatpush1.msra.mxu0 0.0
        %1300 = vmatprep.subr.mxu0 0.0
        %1301 = vmatpush1.msra.mxu0 0.0
        %1302 = vmatprep.subr.mxu0 0.0
        %1303 = vmatpush1.msra.mxu0 0.0
        %1304 = vmatprep.subr.mxu0 0.0
        %1305 = vmatpush1.msra.mxu0 0.0
        %1306 = vmatprep.subr.mxu0 0.0
        %1307 = vmatpush1.msra.mxu0 0.0
        %1308 = vmatprep.subr.mxu0 0.0
        %1309 = vmatpush1.msra.mxu0 0.0
        %1310 = vmatprep.subr.mxu0 0.0
        %1311 = vmatpush1.msra.mxu0 0.0
        %1312 = vmatprep.mubr.f32.mxu0 0.0
        %1313 = vmatmul.mubr.f32.gmra.mrb[0].mxu0 %v1243
        %v1314 = vpop.f32.mrb[0].mxu0
        %v1315 = vadd.f32 0.0, %v1314
        %v1316 = vpop.f32.mrb[0].mxu0
        %1317 = vmatprep.mubr.f32.mxu0 0.0
        %1318 = vmatmul.mubr.f32.gmra.mrb[0].mxu0 %v1246
        %v1319 = vpop.f32.mrb[0].mxu0
        %v1320 = vadd.f32 0.0, %v1319
        %v1321 = vpop.f32.mrb[0].mxu0
        %1322 = vdwg.mxu0
        %v1324 = vsel %vm546, %v1236, 0
        %v1327 = vsel %vm546, %v1237, 0
        %1329 = vmatprep.subr.mxu0 0.0
        %1330 = vmatpush1.msra.mxu0 %v1240
        %1331 = vmatprep.subr.mxu0 0.0
        %1332 = vmatpush1.msra.mxu0 %v1241
        %1333 = vmatprep.subr.mxu0 0.0
        %1334 = vmatpush1.msra.mxu0 0.0
        %1335 = vmatprep.subr.mxu0 0.0
        %1336 = vmatpush1.msra.mxu0 0.0
        %1337 = vmatprep.subr.mxu0 0.0
        %1338 = vmatpush1.msra.mxu0 0.0
        %1339 = vmatprep.subr.mxu0 0.0
        %1340 = vmatpush1.msra.mxu0 0.0
        %1341 = vmatprep.subr.mxu0 0.0
        %1342 = vmatpush1.msra.mxu0 0.0
        %1343 = vmatprep.subr.mxu0 0.0
        %1344 = vmatpush1.msra.mxu0 0.0
        %1345 = vmatprep.subr.mxu0 0.0
        %1346 = vmatpush1.msra.mxu0 0.0
        %1347 = vmatprep.subr.mxu0 0.0
        %1348 = vmatpush1.msra.mxu0 0.0
        %1349 = vmatprep.subr.mxu0 0.0
        %1350 = vmatpush1.msra.mxu0 0.0
        %1351 = vmatprep.subr.mxu0 0.0
        %1352 = vmatpush1.msra.mxu0 0.0
        %1353 = vmatprep.subr.mxu0 0.0
        %1354 = vmatpush1.msra.mxu0 0.0
        %1355 = vmatprep.subr.mxu0 0.0
        %1356 = vmatpush1.msra.mxu0 0.0
        %1357 = vmatprep.subr.mxu0 0.0
        %1358 = vmatpush1.msra.mxu0 0.0
        %1359 = vmatprep.subr.mxu0 0.0
        %1360 = vmatpush1.msra.mxu0 0.0
        %1361 = vmatprep.subr.mxu0 0.0
        %1362 = vmatpush1.msra.mxu0 0.0
        %1363 = vmatprep.subr.mxu0 0.0
        %1364 = vmatpush1.msra.mxu0 0.0
        %1365 = vmatprep.subr.mxu0 0.0
        %1366 = vmatpush1.msra.mxu0 0.0
        %1367 = vmatprep.subr.mxu0 0.0
        %1368 = vmatpush1.msra.mxu0 0.0
        %1369 = vmatprep.subr.mxu0 0.0
        %1370 = vmatpush1.msra.mxu0 0.0
        %1371 = vmatprep.subr.mxu0 0.0
        %1372 = vmatpush1.msra.mxu0 0.0
        %1373 = vmatprep.subr.mxu0 0.0
        %1374 = vmatpush1.msra.mxu0 0.0
        %1375 = vmatprep.subr.mxu0 0.0
        %1376 = vmatpush1.msra.mxu0 0.0
        %1377 = vmatprep.subr.mxu0 0.0
        %1378 = vmatpush1.msra.mxu0 0.0
        %1379 = vmatprep.subr.mxu0 0.0
        %1380 = vmatpush1.msra.mxu0 0.0
        %1381 = vmatprep.subr.mxu0 0.0
        %1382 = vmatpush1.msra.mxu0 0.0
        %1383 = vmatprep.subr.mxu0 0.0
        %1384 = vmatpush1.msra.mxu0 0.0
        %1385 = vmatprep.subr.mxu0 0.0
        %1386 = vmatpush1.msra.mxu0 0.0
        %1387 = vmatprep.subr.mxu0 0.0
        %1388 = vmatpush1.msra.mxu0 0.0
        %1389 = vmatprep.subr.mxu0 0.0
        %1390 = vmatpush1.msra.mxu0 0.0
        %1391 = vmatprep.subr.mxu0 0.0
        %1392 = vmatpush1.msra.mxu0 0.0
        %1393 = vmatprep.mubr.f32.mxu0 0.0
        %1394 = vmatmul.mubr.f32.gmra.mrb[0].mxu0 %v1324
        %v1395 = vpop.f32.mrb[0].mxu0
        %v1396 = vadd.f32 0.0, %v1395
        %v1397 = vpop.f32.mrb[0].mxu0
        %1398 = vmatprep.mubr.f32.mxu0 0.0
        %1399 = vmatmul.mubr.f32.gmra.mrb[0].mxu0 %v1327
        %v1400 = vpop.f32.mrb[0].mxu0
        %v1401 = vadd.f32 0.0, %v1400
        %v1402 = vpop.f32.mrb[0].mxu0
        %1403 = vdwg.mxu0
        %v1404 = vmul.f32 %v1062, %v1315
        %v1405 = vmul.f32 %v1063, %v1320
        %v1406 = vld [vmem:[%s8] sm:$0x1]
        %v1408 = vlaneseq
        %v1409 = vshrl.u32 %v1408, 7
        %v1410 = vsub.s32 0, %v1409
        %v1411 = vrot.slane %v1406, %v1410
        %v1413 = vadd.f32 %v1404, %v1411
        %v1414 = vadd.f32 %v1405, %v1411
        %v1415 = vmul.f32 %v1413, %v1396
        %v1416 = vmul.f32 %v1414, %v1401
        %v1417 = vmax.f32 %v1415, 0.0
        %v1418 = vmax.f32 %v1416, 0.0
        %v1419 = vmul.f32 %v1417, %v1396
        %v1420 = vmul.f32 %v1418, %v1401
        %1421 = vmatprep.subr.mxu0 0.0
        %1422 = vmatpush1.msra.mxu0 %v1419
        %1423 = vmatprep.subr.mxu0 0.0
        %1424 = vmatpush1.msra.mxu0 %v1420
        %1425 = vmatprep.subr.mxu0 0.0
        %1426 = vmatpush1.msra.mxu0 0.0
        %1427 = vmatprep.subr.mxu0 0.0
        %1428 = vmatpush1.msra.mxu0 0.0
        %1429 = vmatprep.subr.mxu0 0.0
        %1430 = vmatpush1.msra.mxu0 0.0
        %1431 = vmatprep.subr.mxu0 0.0
        %1432 = vmatpush1.msra.mxu0 0.0
        %1433 = vmatprep.subr.mxu0 0.0
        %1434 = vmatpush1.msra.mxu0 0.0
        %1435 = vmatprep.subr.mxu0 0.0
        %1436 = vmatpush1.msra.mxu0 0.0
        %1437 = vmatprep.subr.mxu0 0.0
        %1438 = vmatpush1.msra.mxu0 0.0
        %1439 = vmatprep.subr.mxu0 0.0
        %1440 = vmatpush1.msra.mxu0 0.0
        %1441 = vmatprep.subr.mxu0 0.0
        %1442 = vmatpush1.msra.mxu0 0.0
        %1443 = vmatprep.subr.mxu0 0.0
        %1444 = vmatpush1.msra.mxu0 0.0
        %1445 = vmatprep.subr.mxu0 0.0
        %1446 = vmatpush1.msra.mxu0 0.0
        %1447 = vmatprep.subr.mxu0 0.0
        %1448 = vmatpush1.msra.mxu0 0.0
        %1449 = vmatprep.subr.mxu0 0.0
        %1450 = vmatpush1.msra.mxu0 0.0
        %1451 = vmatprep.subr.mxu0 0.0
        %1452 = vmatpush1.msra.mxu0 0.0
        %1453 = vmatprep.subr.mxu0 0.0
        %1454 = vmatpush1.msra.mxu0 0.0
        %1455 = vmatprep.subr.mxu0 0.0
        %1456 = vmatpush1.msra.mxu0 0.0
        %1457 = vmatprep.subr.mxu0 0.0
        %1458 = vmatpush1.msra.mxu0 0.0
        %1459 = vmatprep.subr.mxu0 0.0
        %1460 = vmatpush1.msra.mxu0 0.0
        %1461 = vmatprep.subr.mxu0 0.0
        %1462 = vmatpush1.msra.mxu0 0.0
        %1463 = vmatprep.subr.mxu0 0.0
        %1464 = vmatpush1.msra.mxu0 0.0
        %1465 = vmatprep.subr.mxu0 0.0
        %1466 = vmatpush1.msra.mxu0 0.0
        %1467 = vmatprep.subr.mxu0 0.0
        %1468 = vmatpush1.msra.mxu0 0.0
        %1469 = vmatprep.subr.mxu0 0.0
        %1470 = vmatpush1.msra.mxu0 0.0
        %1471 = vmatprep.subr.mxu0 0.0
        %1472 = vmatpush1.msra.mxu0 0.0
        %1473 = vmatprep.subr.mxu0 0.0
        %1474 = vmatpush1.msra.mxu0 0.0
        %1475 = vmatprep.subr.mxu0 0.0
        %1476 = vmatpush1.msra.mxu0 0.0
        %1477 = vmatprep.subr.mxu0 0.0
        %1478 = vmatpush1.msra.mxu0 0.0
        %1479 = vmatprep.subr.mxu0 0.0
        %1480 = vmatpush1.msra.mxu0 0.0
        %1481 = vmatprep.subr.mxu0 0.0
        %1482 = vmatpush1.msra.mxu0 0.0
        %1483 = vmatprep.subr.mxu0 0.0
        %1484 = vmatpush1.msra.mxu0 0.0
        %1485 = vmatprep.mubr.f32.mxu0 0.0
        %1486 = vmatmul.mubr.f32.gmra.mrb[0].mxu0 %v631
        %v1487 = vpop.f32.mrb[0].mxu0
        %v1488 = vadd.f32 0.0, %v1487
        %v1489 = vpop.f32.mrb[0].mxu0
        %1490 = vmatprep.mubr.f32.mxu0 0.0
        %1491 = vmatmul.mubr.f32.gmra.mrb[0].mxu0 %v634
        %v1492 = vpop.f32.mrb[0].mxu0
        %v1493 = vadd.f32 0.0, %v1492
        %v1494 = vpop.f32.mrb[0].mxu0
        %1495 = vdwg.mxu0
        %v1496 = vld [vmem:[#allocation13] sm:$0xff]
        %v1497 = vld [vmem:[#allocation13 + $0x8] sm:$0xff]
        %v1498 = vld [vmem:[#allocation13 + $0x10] sm:$0xff]
        %v1499 = vld [vmem:[#allocation13 + $0x18] sm:$0xff]
        %v1500 = vld [vmem:[#allocation13 + $0x20] sm:$0xff]
        %v1501 = vld [vmem:[#allocation13 + $0x28] sm:$0xff]
        %v1502 = vld [vmem:[#allocation13 + $0x30] sm:$0xff]
        %v1503 = vld [vmem:[#allocation13 + $0x38] sm:$0xff]
        %v1504 = vld [vmem:[#allocation13 + $0x40] sm:$0xff]
        %v1505 = vld [vmem:[#allocation13 + $0x48] sm:$0xff]
        %v1506 = vld [vmem:[#allocation13 + $0x50] sm:$0xff]
        %v1507 = vld [vmem:[#allocation13 + $0x58] sm:$0xff]
        %v1508 = vld [vmem:[#allocation13 + $0x60] sm:$0xff]
        %v1509 = vld [vmem:[#allocation13 + $0x68] sm:$0xff]
        %v1510 = vld [vmem:[#allocation13 + $0x70] sm:$0xff]
        %v1511 = vld [vmem:[#allocation13 + $0x78] sm:$0xff]
        %s1512 = scalar_lea.vmem [#allocation13], 128
        %v1513 = vld [vmem:[%s1512] sm:$0xff]
        %v1514 = vld [vmem:[%s1512 + $0x8] sm:$0xff]
        %v1515 = vld [vmem:[%s1512 + $0x10] sm:$0xff]
        %v1516 = vld [vmem:[%s1512 + $0x18] sm:$0xff]
        %v1517 = vld [vmem:[%s1512 + $0x20] sm:$0xff]
        %v1518 = vld [vmem:[%s1512 + $0x28] sm:$0xff]
        %v1519 = vld [vmem:[%s1512 + $0x30] sm:$0xff]
        %v1520 = vld [vmem:[%s1512 + $0x38] sm:$0xff]
        %v1521 = vld [vmem:[%s1512 + $0x40] sm:$0xff]
        %v1522 = vld [vmem:[%s1512 + $0x48] sm:$0xff]
        %v1523 = vld [vmem:[%s1512 + $0x50] sm:$0xff]
        %v1524 = vld [vmem:[%s1512 + $0x58] sm:$0xff]
        %v1525 = vld [vmem:[%s1512 + $0x60] sm:$0xff]
        %v1526 = vld [vmem:[%s1512 + $0x68] sm:$0xff]
        %v1527 = vld [vmem:[%s1512 + $0x70] sm:$0xff]
        %v1528 = vld [vmem:[%s1512 + $0x78] sm:$0xff]
        %1529 = vmatprep.subr.mxu0 0.0
        %1530 = vmatpush1.msra.mxu0 %v1513
        %1531 = vmatprep.subr.mxu0 0.0
        %1532 = vmatpush1.msra.mxu0 %v1514
        %1533 = vmatprep.subr.mxu0 0.0
        %1534 = vmatpush1.msra.mxu0 %v1515
        %1535 = vmatprep.subr.mxu0 0.0
        %1536 = vmatpush1.msra.mxu0 %v1516
        %1537 = vmatprep.subr.mxu0 0.0
        %1538 = vmatpush1.msra.mxu0 %v1517
        %1539 = vmatprep.subr.mxu0 0.0
        %1540 = vmatpush1.msra.mxu0 %v1518
        %1541 = vmatprep.subr.mxu0 0.0
        %1542 = vmatpush1.msra.mxu0 %v1519
        %1543 = vmatprep.subr.mxu0 0.0
        %1544 = vmatpush1.msra.mxu0 %v1520
        %1545 = vmatprep.subr.mxu0 0.0
        %1546 = vmatpush1.msra.mxu0 %v1521
        %1547 = vmatprep.subr.mxu0 0.0
        %1548 = vmatpush1.msra.mxu0 %v1522
        %1549 = vmatprep.subr.mxu0 0.0
        %1550 = vmatpush1.msra.mxu0 %v1523
        %1551 = vmatprep.subr.mxu0 0.0
        %1552 = vmatpush1.msra.mxu0 %v1524
        %1553 = vmatprep.subr.mxu0 0.0
        %1554 = vmatpush1.msra.mxu0 %v1525
        %1555 = vmatprep.subr.mxu0 0.0
        %1556 = vmatpush1.msra.mxu0 %v1526
        %1557 = vmatprep.subr.mxu0 0.0
        %1558 = vmatpush1.msra.mxu0 %v1527
        %1559 = vmatprep.subr.mxu0 0.0
        %1560 = vmatpush1.msra.mxu0 %v1528
        %1561 = vmatprep.subr.mxu0 0.0
        %1562 = vmatpush1.msra.mxu0 0.0
        %1563 = vmatprep.subr.mxu0 0.0
        %1564 = vmatpush1.msra.mxu0 0.0
        %1565 = vmatprep.subr.mxu0 0.0
        %1566 = vmatpush1.msra.mxu0 0.0
        %1567 = vmatprep.subr.mxu0 0.0
        %1568 = vmatpush1.msra.mxu0 0.0
        %1569 = vmatprep.subr.mxu0 0.0
        %1570 = vmatpush1.msra.mxu0 0.0
        %1571 = vmatprep.subr.mxu0 0.0
        %1572 = vmatpush1.msra.mxu0 0.0
        %1573 = vmatprep.subr.mxu0 0.0
        %1574 = vmatpush1.msra.mxu0 0.0
        %1575 = vmatprep.subr.mxu0 0.0
        %1576 = vmatpush1.msra.mxu0 0.0
        %1577 = vmatprep.subr.mxu0 0.0
        %1578 = vmatpush1.msra.mxu0 0.0
        %1579 = vmatprep.subr.mxu0 0.0
        %1580 = vmatpush1.msra.mxu0 0.0
        %1581 = vmatprep.subr.mxu0 0.0
        %1582 = vmatpush1.msra.mxu0 0.0
        %1583 = vmatprep.subr.mxu0 0.0
        %1584 = vmatpush1.msra.mxu0 0.0
        %1585 = vmatprep.subr.mxu0 0.0
        %1586 = vmatpush1.msra.mxu0 0.0
        %1587 = vmatprep.subr.mxu0 0.0
        %1588 = vmatpush1.msra.mxu0 0.0
        %1589 = vmatprep.subr.mxu0 0.0
        %1590 = vmatpush1.msra.mxu0 0.0
        %1591 = vmatprep.subr.mxu0 0.0
        %1592 = vmatpush1.msra.mxu0 0.0
        %1593 = vmatprep.mubr.f32.mxu0 0.0
        %1594 = vmatmul.mubr.f32.gmra.mrb[0].mxu0 %v1419
        %v1595 = vpop.f32.mrb[0].mxu0
        %v1596 = vadd.f32 0.0, %v1595
        %v1597 = vpop.f32.mrb[0].mxu0
        %1598 = vmatprep.mubr.f32.mxu0 0.0
        %1599 = vmatmul.mubr.f32.gmra.mrb[0].mxu0 %v1420
        %v1600 = vpop.f32.mrb[0].mxu0
        %v1601 = vadd.f32 0.0, %v1600
        %v1602 = vpop.f32.mrb[0].mxu0
        %1603 = vdwg.mxu0
        %1604 = vmatprep.subr.mxu0 0.0
        %1605 = vmatpush1.msra.mxu0 %v1496
        %1606 = vmatprep.subr.mxu0 0.0
        %1607 = vmatpush1.msra.mxu0 %v1497
        %1608 = vmatprep.subr.mxu0 0.0
        %1609 = vmatpush1.msra.mxu0 %v1498
        %1610 = vmatprep.subr.mxu0 0.0
        %1611 = vmatpush1.msra.mxu0 %v1499
        %1612 = vmatprep.subr.mxu0 0.0
        %1613 = vmatpush1.msra.mxu0 %v1500
        %1614 = vmatprep.subr.mxu0 0.0
        %1615 = vmatpush1.msra.mxu0 %v1501
        %1616 = vmatprep.subr.mxu0 0.0
        %1617 = vmatpush1.msra.mxu0 %v1502
        %1618 = vmatprep.subr.mxu0 0.0
        %1619 = vmatpush1.msra.mxu0 %v1503
        %1620 = vmatprep.subr.mxu0 0.0
        %1621 = vmatpush1.msra.mxu0 %v1504
        %1622 = vmatprep.subr.mxu0 0.0
        %1623 = vmatpush1.msra.mxu0 %v1505
        %1624 = vmatprep.subr.mxu0 0.0
        %1625 = vmatpush1.msra.mxu0 %v1506
        %1626 = vmatprep.subr.mxu0 0.0
        %1627 = vmatpush1.msra.mxu0 %v1507
        %1628 = vmatprep.subr.mxu0 0.0
        %1629 = vmatpush1.msra.mxu0 %v1508
        %1630 = vmatprep.subr.mxu0 0.0
        %1631 = vmatpush1.msra.mxu0 %v1509
        %1632 = vmatprep.subr.mxu0 0.0
        %1633 = vmatpush1.msra.mxu0 %v1510
        %1634 = vmatprep.subr.mxu0 0.0
        %1635 = vmatpush1.msra.mxu0 %v1511
        %1636 = vmatprep.subr.mxu0 0.0
        %1637 = vmatpush1.msra.mxu0 0.0
        %1638 = vmatprep.subr.mxu0 0.0
        %1639 = vmatpush1.msra.mxu0 0.0
        %1640 = vmatprep.subr.mxu0 0.0
        %1641 = vmatpush1.msra.mxu0 0.0
        %1642 = vmatprep.subr.mxu0 0.0
        %1643 = vmatpush1.msra.mxu0 0.0
        %1644 = vmatprep.subr.mxu0 0.0
        %1645 = vmatpush1.msra.mxu0 0.0
        %1646 = vmatprep.subr.mxu0 0.0
        %1647 = vmatpush1.msra.mxu0 0.0
        %1648 = vmatprep.subr.mxu0 0.0
        %1649 = vmatpush1.msra.mxu0 0.0
        %1650 = vmatprep.subr.mxu0 0.0
        %1651 = vmatpush1.msra.mxu0 0.0
        %1652 = vmatprep.subr.mxu0 0.0
        %1653 = vmatpush1.msra.mxu0 0.0
        %1654 = vmatprep.subr.mxu0 0.0
        %1655 = vmatpush1.msra.mxu0 0.0
        %1656 = vmatprep.subr.mxu0 0.0
        %1657 = vmatpush1.msra.mxu0 0.0
        %1658 = vmatprep.subr.mxu0 0.0
        %1659 = vmatpush1.msra.mxu0 0.0
        %1660 = vmatprep.subr.mxu0 0.0
        %1661 = vmatpush1.msra.mxu0 0.0
        %1662 = vmatprep.subr.mxu0 0.0
        %1663 = vmatpush1.msra.mxu0 0.0
        %1664 = vmatprep.subr.mxu0 0.0
        %1665 = vmatpush1.msra.mxu0 0.0
        %1666 = vmatprep.subr.mxu0 0.0
        %1667 = vmatpush1.msra.mxu0 0.0
        %1668 = vmatprep.mubr.f32.mxu0 0.0
        %1669 = vmatmul.mubr.f32.gmra.mrb[0].mxu0 %v1488
        %v1670 = vpop.f32.mrb[0].mxu0
        %v1671 = vadd.f32 %v1596, %v1670
        %v1672 = vpop.f32.mrb[0].mxu0
        %1673 = vmatprep.mubr.f32.mxu0 0.0
        %1674 = vmatmul.mubr.f32.gmra.mrb[0].mxu0 %v1493
        %v1675 = vpop.f32.mrb[0].mxu0
        %v1676 = vadd.f32 %v1601, %v1675
        %v1677 = vpop.f32.mrb[0].mxu0
        %1678 = vdwg.mxu0
        %1679 = vmatprep.subr.mxu0 0.0
        %1680 = vmatpush1.msra.mxu0 %v1419
        %1681 = vmatprep.subr.mxu0 0.0
        %1682 = vmatpush1.msra.mxu0 %v1420
        %1683 = vmatprep.subr.mxu0 0.0
        %1684 = vmatpush1.msra.mxu0 0.0
        %1685 = vmatprep.subr.mxu0 0.0
        %1686 = vmatpush1.msra.mxu0 0.0
        %1687 = vmatprep.subr.mxu0 0.0
        %1688 = vmatpush1.msra.mxu0 0.0
        %1689 = vmatprep.subr.mxu0 0.0
        %1690 = vmatpush1.msra.mxu0 0.0
        %1691 = vmatprep.subr.mxu0 0.0
        %1692 = vmatpush1.msra.mxu0 0.0
        %1693 = vmatprep.subr.mxu0 0.0
        %1694 = vmatpush1.msra.mxu0 0.0
        %1695 = vmatprep.subr.mxu0 0.0
        %1696 = vmatpush1.msra.mxu0 0.0
        %1697 = vmatprep.subr.mxu0 0.0
        %1698 = vmatpush1.msra.mxu0 0.0
        %1699 = vmatprep.subr.mxu0 0.0
        %1700 = vmatpush1.msra.mxu0 0.0
        %1701 = vmatprep.subr.mxu0 0.0
        %1702 = vmatpush1.msra.mxu0 0.0
        %1703 = vmatprep.subr.mxu0 0.0
        %1704 = vmatpush1.msra.mxu0 0.0
        %1705 = vmatprep.subr.mxu0 0.0
        %1706 = vmatpush1.msra.mxu0 0.0
        %1707 = vmatprep.subr.mxu0 0.0
        %1708 = vmatpush1.msra.mxu0 0.0
        %1709 = vmatprep.subr.mxu0 0.0
        %1710 = vmatpush1.msra.mxu0 0.0
        %1711 = vmatprep.subr.mxu0 0.0
        %1712 = vmatpush1.msra.mxu0 0.0
        %1713 = vmatprep.subr.mxu0 0.0
        %1714 = vmatpush1.msra.mxu0 0.0
        %1715 = vmatprep.subr.mxu0 0.0
        %1716 = vmatpush1.msra.mxu0 0.0
        %1717 = vmatprep.subr.mxu0 0.0
        %1718 = vmatpush1.msra.mxu0 0.0
        %1719 = vmatprep.subr.mxu0 0.0
        %1720 = vmatpush1.msra.mxu0 0.0
        %1721 = vmatprep.subr.mxu0 0.0
        %1722 = vmatpush1.msra.mxu0 0.0
        %1723 = vmatprep.subr.mxu0 0.0
        %1724 = vmatpush1.msra.mxu0 0.0
        %1725 = vmatprep.subr.mxu0 0.0
        %1726 = vmatpush1.msra.mxu0 0.0
        %1727 = vmatprep.subr.mxu0 0.0
        %1728 = vmatpush1.msra.mxu0 0.0
        %1729 = vmatprep.subr.mxu0 0.0
        %1730 = vmatpush1.msra.mxu0 0.0
        %1731 = vmatprep.subr.mxu0 0.0
        %1732 = vmatpush1.msra.mxu0 0.0
        %1733 = vmatprep.subr.mxu0 0.0
        %1734 = vmatpush1.msra.mxu0 0.0
        %1735 = vmatprep.subr.mxu0 0.0
        %1736 = vmatpush1.msra.mxu0 0.0
        %1737 = vmatprep.subr.mxu0 0.0
        %1738 = vmatpush1.msra.mxu0 0.0
        %1739 = vmatprep.subr.mxu0 0.0
        %1740 = vmatpush1.msra.mxu0 0.0
        %1741 = vmatprep.subr.mxu0 0.0
        %1742 = vmatpush1.msra.mxu0 0.0
        %1743 = vmatprep.mubr.f32.mxu0 0.0
        %1744 = vmatmul.mubr.f32.gmra.mrb[0].mxu0 %v892
        %v1745 = vpop.f32.mrb[0].mxu0
        %v1746 = vadd.f32 0.0, %v1745
        %v1747 = vpop.f32.mrb[0].mxu0
        %1748 = vmatprep.mubr.f32.mxu0 0.0
        %1749 = vmatmul.mubr.f32.gmra.mrb[0].mxu0 %v895
        %v1750 = vpop.f32.mrb[0].mxu0
        %v1751 = vadd.f32 0.0, %v1750
        %v1752 = vpop.f32.mrb[0].mxu0
        %1753 = vdwg.mxu0
        %s1754 = scalar_lea.vmem [#allocation13], 256
        %v1755 = vld [vmem:[%s1754] sm:$0xff]
        %v1756 = vld [vmem:[%s1754 + $0x8] sm:$0xff]
        %v1757 = vld [vmem:[%s1754 + $0x10] sm:$0xff]
        %v1758 = vld [vmem:[%s1754 + $0x18] sm:$0xff]
        %v1759 = vld [vmem:[%s1754 + $0x20] sm:$0xff]
        %v1760 = vld [vmem:[%s1754 + $0x28] sm:$0xff]
        %v1761 = vld [vmem:[%s1754 + $0x30] sm:$0xff]
        %v1762 = vld [vmem:[%s1754 + $0x38] sm:$0xff]
        %v1763 = vld [vmem:[%s1754 + $0x40] sm:$0xff]
        %v1764 = vld [vmem:[%s1754 + $0x48] sm:$0xff]
        %v1765 = vld [vmem:[%s1754 + $0x50] sm:$0xff]
        %v1766 = vld [vmem:[%s1754 + $0x58] sm:$0xff]
        %v1767 = vld [vmem:[%s1754 + $0x60] sm:$0xff]
        %v1768 = vld [vmem:[%s1754 + $0x68] sm:$0xff]
        %v1769 = vld [vmem:[%s1754 + $0x70] sm:$0xff]
        %v1770 = vld [vmem:[%s1754 + $0x78] sm:$0xff]
        %1771 = vmatprep.subr.mxu0 0.0
        %1772 = vmatpush1.msra.mxu0 %v1755
        %1773 = vmatprep.subr.mxu0 0.0
        %1774 = vmatpush1.msra.mxu0 %v1756
        %1775 = vmatprep.subr.mxu0 0.0
        %1776 = vmatpush1.msra.mxu0 %v1757
        %1777 = vmatprep.subr.mxu0 0.0
        %1778 = vmatpush1.msra.mxu0 %v1758
        %1779 = vmatprep.subr.mxu0 0.0
        %1780 = vmatpush1.msra.mxu0 %v1759
        %1781 = vmatprep.subr.mxu0 0.0
        %1782 = vmatpush1.msra.mxu0 %v1760
        %1783 = vmatprep.subr.mxu0 0.0
        %1784 = vmatpush1.msra.mxu0 %v1761
        %1785 = vmatprep.subr.mxu0 0.0
        %1786 = vmatpush1.msra.mxu0 %v1762
        %1787 = vmatprep.subr.mxu0 0.0
        %1788 = vmatpush1.msra.mxu0 %v1763
        %1789 = vmatprep.subr.mxu0 0.0
        %1790 = vmatpush1.msra.mxu0 %v1764
        %1791 = vmatprep.subr.mxu0 0.0
        %1792 = vmatpush1.msra.mxu0 %v1765
        %1793 = vmatprep.subr.mxu0 0.0
        %1794 = vmatpush1.msra.mxu0 %v1766
        %1795 = vmatprep.subr.mxu0 0.0
        %1796 = vmatpush1.msra.mxu0 %v1767
        %1797 = vmatprep.subr.mxu0 0.0
        %1798 = vmatpush1.msra.mxu0 %v1768
        %1799 = vmatprep.subr.mxu0 0.0
        %1800 = vmatpush1.msra.mxu0 %v1769
        %1801 = vmatprep.subr.mxu0 0.0
        %1802 = vmatpush1.msra.mxu0 %v1770
        %1803 = vmatprep.subr.mxu0 0.0
        %1804 = vmatpush1.msra.mxu0 0.0
        %1805 = vmatprep.subr.mxu0 0.0
        %1806 = vmatpush1.msra.mxu0 0.0
        %1807 = vmatprep.subr.mxu0 0.0
        %1808 = vmatpush1.msra.mxu0 0.0
        %1809 = vmatprep.subr.mxu0 0.0
        %1810 = vmatpush1.msra.mxu0 0.0
        %1811 = vmatprep.subr.mxu0 0.0
        %1812 = vmatpush1.msra.mxu0 0.0
        %1813 = vmatprep.subr.mxu0 0.0
        %1814 = vmatpush1.msra.mxu0 0.0
        %1815 = vmatprep.subr.mxu0 0.0
        %1816 = vmatpush1.msra.mxu0 0.0
        %1817 = vmatprep.subr.mxu0 0.0
        %1818 = vmatpush1.msra.mxu0 0.0
        %1819 = vmatprep.subr.mxu0 0.0
        %1820 = vmatpush1.msra.mxu0 0.0
        %1821 = vmatprep.subr.mxu0 0.0
        %1822 = vmatpush1.msra.mxu0 0.0
        %1823 = vmatprep.subr.mxu0 0.0
        %1824 = vmatpush1.msra.mxu0 0.0
        %1825 = vmatprep.subr.mxu0 0.0
        %1826 = vmatpush1.msra.mxu0 0.0
        %1827 = vmatprep.subr.mxu0 0.0
        %1828 = vmatpush1.msra.mxu0 0.0
        %1829 = vmatprep.subr.mxu0 0.0
        %1830 = vmatpush1.msra.mxu0 0.0
        %1831 = vmatprep.subr.mxu0 0.0
        %1832 = vmatpush1.msra.mxu0 0.0
        %1833 = vmatprep.subr.mxu0 0.0
        %1834 = vmatpush1.msra.mxu0 0.0
        %1835 = vmatprep.mubr.f32.mxu0 0.0
        %1836 = vmatmul.mubr.f32.gmra.mrb[0].mxu0 %v1746
        %v1837 = vpop.f32.mrb[0].mxu0
        %v1838 = vadd.f32 0.0, %v1837
        %v1839 = vpop.f32.mrb[0].mxu0
        %1840 = vmatprep.mubr.f32.mxu0 0.0
        %1841 = vmatmul.mubr.f32.gmra.mrb[0].mxu0 %v1751
        %v1842 = vpop.f32.mrb[0].mxu0
        %v1843 = vadd.f32 0.0, %v1842
        %v1844 = vpop.f32.mrb[0].mxu0
        %1845 = vdwg.mxu0
        %v1846 = vadd.f32 %v1671, %v1838
        %v1847 = vadd.f32 %v1676, %v1843
        %1848 = vmatprep.subr.mxu0 0.0
        %1849 = vmatpush1.msra.mxu0 %v1236
        %1850 = vmatprep.subr.mxu0 0.0
        %1851 = vmatpush1.msra.mxu0 %v1237
        %1852 = vmatprep.subr.mxu0 0.0
        %1853 = vmatpush1.msra.mxu0 0.0
        %1854 = vmatprep.subr.mxu0 0.0
        %1855 = vmatpush1.msra.mxu0 0.0
        %1856 = vmatprep.subr.mxu0 0.0
        %1857 = vmatpush1.msra.mxu0 0.0
        %1858 = vmatprep.subr.mxu0 0.0
        %1859 = vmatpush1.msra.mxu0 0.0
        %1860 = vmatprep.subr.mxu0 0.0
        %1861 = vmatpush1.msra.mxu0 0.0
        %1862 = vmatprep.subr.mxu0 0.0
        %1863 = vmatpush1.msra.mxu0 0.0
        %1864 = vmatprep.subr.mxu0 0.0
        %1865 = vmatpush1.msra.mxu0 0.0
        %1866 = vmatprep.subr.mxu0 0.0
        %1867 = vmatpush1.msra.mxu0 0.0
        %1868 = vmatprep.subr.mxu0 0.0
        %1869 = vmatpush1.msra.mxu0 0.0
        %1870 = vmatprep.subr.mxu0 0.0
        %1871 = vmatpush1.msra.mxu0 0.0
        %1872 = vmatprep.subr.mxu0 0.0
        %1873 = vmatpush1.msra.mxu0 0.0
        %1874 = vmatprep.subr.mxu0 0.0
        %1875 = vmatpush1.msra.mxu0 0.0
        %1876 = vmatprep.subr.mxu0 0.0
        %1877 = vmatpush1.msra.mxu0 0.0
        %1878 = vmatprep.subr.mxu0 0.0
        %1879 = vmatpush1.msra.mxu0 0.0
        %1880 = vmatprep.subr.mxu0 0.0
        %1881 = vmatpush1.msra.mxu0 0.0
        %1882 = vmatprep.subr.mxu0 0.0
        %1883 = vmatpush1.msra.mxu0 0.0
        %1884 = vmatprep.subr.mxu0 0.0
        %1885 = vmatpush1.msra.mxu0 0.0
        %1886 = vmatprep.subr.mxu0 0.0
        %1887 = vmatpush1.msra.mxu0 0.0
        %1888 = vmatprep.subr.mxu0 0.0
        %1889 = vmatpush1.msra.mxu0 0.0
        %1890 = vmatprep.subr.mxu0 0.0
        %1891 = vmatpush1.msra.mxu0 0.0
        %1892 = vmatprep.subr.mxu0 0.0
        %1893 = vmatpush1.msra.mxu0 0.0
        %1894 = vmatprep.subr.mxu0 0.0
        %1895 = vmatpush1.msra.mxu0 0.0
        %1896 = vmatprep.subr.mxu0 0.0
        %1897 = vmatpush1.msra.mxu0 0.0
        %1898 = vmatprep.subr.mxu0 0.0
        %1899 = vmatpush1.msra.mxu0 0.0
        %1900 = vmatprep.subr.mxu0 0.0
        %1901 = vmatpush1.msra.mxu0 0.0
        %1902 = vmatprep.subr.mxu0 0.0
        %1903 = vmatpush1.msra.mxu0 0.0
        %1904 = vmatprep.subr.mxu0 0.0
        %1905 = vmatpush1.msra.mxu0 0.0
        %1906 = vmatprep.subr.mxu0 0.0
        %1907 = vmatpush1.msra.mxu0 0.0
        %1908 = vmatprep.subr.mxu0 0.0
        %1909 = vmatpush1.msra.mxu0 0.0
        %1910 = vmatprep.subr.mxu0 0.0
        %1911 = vmatpush1.msra.mxu0 0.0
        %1912 = vmatprep.mubr.f32.mxu0 0.0
        %1913 = vmatmul.mubr.f32.gmra.mrb[0].mxu0 %v1065
        %v1914 = vpop.f32.mrb[0].mxu0
        %v1915 = vadd.f32 0.0, %v1914
        %v1916 = vpop.f32.mrb[0].mxu0
        %1917 = vmatprep.mubr.f32.mxu0 0.0
        %1918 = vmatmul.mubr.f32.gmra.mrb[0].mxu0 %v1068
        %v1919 = vpop.f32.mrb[0].mxu0
        %v1920 = vadd.f32 0.0, %v1919
        %v1921 = vpop.f32.mrb[0].mxu0
        %1922 = vdwg.mxu0
        %v1924 = vsel %vm546, %v1915, 0
        %v1927 = vsel %vm546, %v1920, 0
        %1929 = vmatprep.subr.mxu0 0.0
        %1930 = vmatpush1.msra.mxu0 %v1145
        %1931 = vmatprep.subr.mxu0 0.0
        %1932 = vmatpush1.msra.mxu0 %v1146
        %1933 = vmatprep.subr.mxu0 0.0
        %1934 = vmatpush1.msra.mxu0 0.0
        %1935 = vmatprep.subr.mxu0 0.0
        %1936 = vmatpush1.msra.mxu0 0.0
        %1937 = vmatprep.subr.mxu0 0.0
        %1938 = vmatpush1.msra.mxu0 0.0
        %1939 = vmatprep.subr.mxu0 0.0
        %1940 = vmatpush1.msra.mxu0 0.0
        %1941 = vmatprep.subr.mxu0 0.0
        %1942 = vmatpush1.msra.mxu0 0.0
        %1943 = vmatprep.subr.mxu0 0.0
        %1944 = vmatpush1.msra.mxu0 0.0
        %1945 = vmatprep.subr.mxu0 0.0
        %1946 = vmatpush1.msra.mxu0 0.0
        %1947 = vmatprep.subr.mxu0 0.0
        %1948 = vmatpush1.msra.mxu0 0.0
        %1949 = vmatprep.subr.mxu0 0.0
        %1950 = vmatpush1.msra.mxu0 0.0
        %1951 = vmatprep.subr.mxu0 0.0
        %1952 = vmatpush1.msra.mxu0 0.0
        %1953 = vmatprep.subr.mxu0 0.0
        %1954 = vmatpush1.msra.mxu0 0.0
        %1955 = vmatprep.subr.mxu0 0.0
        %1956 = vmatpush1.msra.mxu0 0.0
        %1957 = vmatprep.subr.mxu0 0.0
        %1958 = vmatpush1.msra.mxu0 0.0
        %1959 = vmatprep.subr.mxu0 0.0
        %1960 = vmatpush1.msra.mxu0 0.0
        %1961 = vmatprep.subr.mxu0 0.0
        %1962 = vmatpush1.msra.mxu0 0.0
        %1963 = vmatprep.subr.mxu0 0.0
        %1964 = vmatpush1.msra.mxu0 0.0
        %1965 = vmatprep.subr.mxu0 0.0
        %1966 = vmatpush1.msra.mxu0 0.0
        %1967 = vmatprep.subr.mxu0 0.0
        %1968 = vmatpush1.msra.mxu0 0.0
        %1969 = vmatprep.subr.mxu0 0.0
        %1970 = vmatpush1.msra.mxu0 0.0
        %1971 = vmatprep.subr.mxu0 0.0
        %1972 = vmatpush1.msra.mxu0 0.0
        %1973 = vmatprep.subr.mxu0 0.0
        %1974 = vmatpush1.msra.mxu0 0.0
        %1975 = vmatprep.subr.mxu0 0.0
        %1976 = vmatpush1.msra.mxu0 0.0
        %1977 = vmatprep.subr.mxu0 0.0
        %1978 = vmatpush1.msra.mxu0 0.0
        %1979 = vmatprep.subr.mxu0 0.0
        %1980 = vmatpush1.msra.mxu0 0.0
        %1981 = vmatprep.subr.mxu0 0.0
        %1982 = vmatpush1.msra.mxu0 0.0
        %1983 = vmatprep.subr.mxu0 0.0
        %1984 = vmatpush1.msra.mxu0 0.0
        %1985 = vmatprep.subr.mxu0 0.0
        %1986 = vmatpush1.msra.mxu0 0.0
        %1987 = vmatprep.subr.mxu0 0.0
        %1988 = vmatpush1.msra.mxu0 0.0
        %1989 = vmatprep.subr.mxu0 0.0
        %1990 = vmatpush1.msra.mxu0 0.0
        %1991 = vmatprep.subr.mxu0 0.0
        %1992 = vmatpush1.msra.mxu0 0.0
        %1993 = vmatprep.mubr.f32.mxu0 0.0
        %1994 = vmatmul.mubr.f32.gmra.mrb[0].mxu0 %v1924
        %v1995 = vpop.f32.mrb[0].mxu0
        %v1996 = vadd.f32 0.0, %v1995
        %v1997 = vpop.f32.mrb[0].mxu0
        %1998 = vmatprep.mubr.f32.mxu0 0.0
        %1999 = vmatmul.mubr.f32.gmra.mrb[0].mxu0 %v1927
        %v2000 = vpop.f32.mrb[0].mxu0
        %v2001 = vadd.f32 0.0, %v2000
        %v2002 = vpop.f32.mrb[0].mxu0
        %2003 = vdwg.mxu0
        %v2004 = vadd.f32 %v1996, 1e-08
        %v2005 = vadd.f32 %v2001, 1e-08
        %v2006 = vrcp.pop %v2004
        %v2007 = vrcp.pop %v2005
        %v2008 = vmul.f32 %v2006, 9.0
        %v2009 = vmul.f32 %v2007, 9.0
        %v2010 = vmax.f32 %v1996, 0.0
        %v2011 = vmax.f32 %v2001, 0.0
        %v2012 = vmin.f32 %v2010, 1.0
        %v2013 = vmin.f32 %v2011, 1.0
        %v2014 = vmul.f32 %v2008, %v2012
        %v2015 = vmul.f32 %v2009, %v2013
        %v2017 = vsel %vm546, %v2014, 0
        %v2020 = vsel %vm546, %v2015, 0
        %2022 = vmatprep.subr.mxu0 0.0
        %2023 = vmatpush1.msra.mxu0 %v1240
        %2024 = vmatprep.subr.mxu0 0.0
        %2025 = vmatpush1.msra.mxu0 %v1241
        %2026 = vmatprep.subr.mxu0 0.0
        %2027 = vmatpush1.msra.mxu0 0.0
        %2028 = vmatprep.subr.mxu0 0.0
        %2029 = vmatpush1.msra.mxu0 0.0
        %2030 = vmatprep.subr.mxu0 0.0
        %2031 = vmatpush1.msra.mxu0 0.0
        %2032 = vmatprep.subr.mxu0 0.0
        %2033 = vmatpush1.msra.mxu0 0.0
        %2034 = vmatprep.subr.mxu0 0.0
        %2035 = vmatpush1.msra.mxu0 0.0
        %2036 = vmatprep.subr.mxu0 0.0
        %2037 = vmatpush1.msra.mxu0 0.0
        %2038 = vmatprep.subr.mxu0 0.0
        %2039 = vmatpush1.msra.mxu0 0.0
        %2040 = vmatprep.subr.mxu0 0.0
        %2041 = vmatpush1.msra.mxu0 0.0
        %2042 = vmatprep.subr.mxu0 0.0
        %2043 = vmatpush1.msra.mxu0 0.0
        %2044 = vmatprep.subr.mxu0 0.0
        %2045 = vmatpush1.msra.mxu0 0.0
        %2046 = vmatprep.subr.mxu0 0.0
        %2047 = vmatpush1.msra.mxu0 0.0
        %2048 = vmatprep.subr.mxu0 0.0
        %2049 = vmatpush1.msra.mxu0 0.0
        %2050 = vmatprep.subr.mxu0 0.0
        %2051 = vmatpush1.msra.mxu0 0.0
        %2052 = vmatprep.subr.mxu0 0.0
        %2053 = vmatpush1.msra.mxu0 0.0
        %2054 = vmatprep.subr.mxu0 0.0
        %2055 = vmatpush1.msra.mxu0 0.0
        %2056 = vmatprep.subr.mxu0 0.0
        %2057 = vmatpush1.msra.mxu0 0.0
        %2058 = vmatprep.subr.mxu0 0.0
        %2059 = vmatpush1.msra.mxu0 0.0
        %2060 = vmatprep.subr.mxu0 0.0
        %2061 = vmatpush1.msra.mxu0 0.0
        %2062 = vmatprep.subr.mxu0 0.0
        %2063 = vmatpush1.msra.mxu0 0.0
        %2064 = vmatprep.subr.mxu0 0.0
        %2065 = vmatpush1.msra.mxu0 0.0
        %2066 = vmatprep.subr.mxu0 0.0
        %2067 = vmatpush1.msra.mxu0 0.0
        %2068 = vmatprep.subr.mxu0 0.0
        %2069 = vmatpush1.msra.mxu0 0.0
        %2070 = vmatprep.subr.mxu0 0.0
        %2071 = vmatpush1.msra.mxu0 0.0
        %2072 = vmatprep.subr.mxu0 0.0
        %2073 = vmatpush1.msra.mxu0 0.0
        %2074 = vmatprep.subr.mxu0 0.0
        %2075 = vmatpush1.msra.mxu0 0.0
        %2076 = vmatprep.subr.mxu0 0.0
        %2077 = vmatpush1.msra.mxu0 0.0
        %2078 = vmatprep.subr.mxu0 0.0
        %2079 = vmatpush1.msra.mxu0 0.0
        %2080 = vmatprep.subr.mxu0 0.0
        %2081 = vmatpush1.msra.mxu0 0.0
        %2082 = vmatprep.subr.mxu0 0.0
        %2083 = vmatpush1.msra.mxu0 0.0
        %2084 = vmatprep.subr.mxu0 0.0
        %2085 = vmatpush1.msra.mxu0 0.0
        %2086 = vmatprep.mubr.f32.mxu0 0.0
        %2087 = vmatmul.mubr.f32.gmra.mrb[0].mxu0 %v2017
        %v2088 = vpop.f32.mrb[0].mxu0
        %v2089 = vadd.f32 0.0, %v2088
        %v2090 = vpop.f32.mrb[0].mxu0
        %2091 = vmatprep.mubr.f32.mxu0 0.0
        %2092 = vmatmul.mubr.f32.gmra.mrb[0].mxu0 %v2020
        %v2093 = vpop.f32.mrb[0].mxu0
        %v2094 = vadd.f32 0.0, %v2093
        %v2095 = vpop.f32.mrb[0].mxu0
        %2096 = vdwg.mxu0
        %v2098 = vsel %vm546, %v2012, 0
        %v2101 = vsel %vm546, %v2013, 0
        %2103 = vmatprep.subr.mxu0 0.0
        %2104 = vmatpush1.msra.mxu0 %v1240
        %2105 = vmatprep.subr.mxu0 0.0
        %2106 = vmatpush1.msra.mxu0 %v1241
        %2107 = vmatprep.subr.mxu0 0.0
        %2108 = vmatpush1.msra.mxu0 0.0
        %2109 = vmatprep.subr.mxu0 0.0
        %2110 = vmatpush1.msra.mxu0 0.0
        %2111 = vmatprep.subr.mxu0 0.0
        %2112 = vmatpush1.msra.mxu0 0.0
        %2113 = vmatprep.subr.mxu0 0.0
        %2114 = vmatpush1.msra.mxu0 0.0
        %2115 = vmatprep.subr.mxu0 0.0
        %2116 = vmatpush1.msra.mxu0 0.0
        %2117 = vmatprep.subr.mxu0 0.0
        %2118 = vmatpush1.msra.mxu0 0.0
        %2119 = vmatprep.subr.mxu0 0.0
        %2120 = vmatpush1.msra.mxu0 0.0
        %2121 = vmatprep.subr.mxu0 0.0
        %2122 = vmatpush1.msra.mxu0 0.0
        %2123 = vmatprep.subr.mxu0 0.0
        %2124 = vmatpush1.msra.mxu0 0.0
        %2125 = vmatprep.subr.mxu0 0.0
        %2126 = vmatpush1.msra.mxu0 0.0
        %2127 = vmatprep.subr.mxu0 0.0
        %2128 = vmatpush1.msra.mxu0 0.0
        %2129 = vmatprep.subr.mxu0 0.0
        %2130 = vmatpush1.msra.mxu0 0.0
        %2131 = vmatprep.subr.mxu0 0.0
        %2132 = vmatpush1.msra.mxu0 0.0
        %2133 = vmatprep.subr.mxu0 0.0
        %2134 = vmatpush1.msra.mxu0 0.0
        %2135 = vmatprep.subr.mxu0 0.0
        %2136 = vmatpush1.msra.mxu0 0.0
        %2137 = vmatprep.subr.mxu0 0.0
        %2138 = vmatpush1.msra.mxu0 0.0
        %2139 = vmatprep.subr.mxu0 0.0
        %2140 = vmatpush1.msra.mxu0 0.0
        %2141 = vmatprep.subr.mxu0 0.0
        %2142 = vmatpush1.msra.mxu0 0.0
        %2143 = vmatprep.subr.mxu0 0.0
        %2144 = vmatpush1.msra.mxu0 0.0
        %2145 = vmatprep.subr.mxu0 0.0
        %2146 = vmatpush1.msra.mxu0 0.0
        %2147 = vmatprep.subr.mxu0 0.0
        %2148 = vmatpush1.msra.mxu0 0.0
        %2149 = vmatprep.subr.mxu0 0.0
        %2150 = vmatpush1.msra.mxu0 0.0
        %2151 = vmatprep.subr.mxu0 0.0
        %2152 = vmatpush1.msra.mxu0 0.0
        %2153 = vmatprep.subr.mxu0 0.0
        %2154 = vmatpush1.msra.mxu0 0.0
        %2155 = vmatprep.subr.mxu0 0.0
        %2156 = vmatpush1.msra.mxu0 0.0
        %2157 = vmatprep.subr.mxu0 0.0
        %2158 = vmatpush1.msra.mxu0 0.0
        %2159 = vmatprep.subr.mxu0 0.0
        %2160 = vmatpush1.msra.mxu0 0.0
        %2161 = vmatprep.subr.mxu0 0.0
        %2162 = vmatpush1.msra.mxu0 0.0
        %2163 = vmatprep.subr.mxu0 0.0
        %2164 = vmatpush1.msra.mxu0 0.0
        %2165 = vmatprep.subr.mxu0 0.0
        %2166 = vmatpush1.msra.mxu0 0.0
        %2167 = vmatprep.mubr.f32.mxu0 0.0
        %2168 = vmatmul.mubr.f32.gmra.mrb[0].mxu0 %v2098
        %v2169 = vpop.f32.mrb[0].mxu0
        %v2170 = vadd.f32 0.0, %v2169
        %v2171 = vpop.f32.mrb[0].mxu0
        %2172 = vmatprep.mubr.f32.mxu0 0.0
        %2173 = vmatmul.mubr.f32.gmra.mrb[0].mxu0 %v2101
        %v2174 = vpop.f32.mrb[0].mxu0
        %v2175 = vadd.f32 0.0, %v2174
        %v2176 = vpop.f32.mrb[0].mxu0
        %2177 = vdwg.mxu0
        %v2178 = vmul.f32 %v1846, %v2089
        %v2179 = vmul.f32 %v1847, %v2094
        %v2180 = vld [vmem:[%s9] sm:$0x1]
        %v2182 = vlaneseq
        %v2183 = vshrl.u32 %v2182, 7
        %v2184 = vsub.s32 0, %v2183
        %v2185 = vrot.slane %v2180, %v2184
        %v2187 = vadd.f32 %v2178, %v2185
        %v2188 = vadd.f32 %v2179, %v2185
        %v2189 = vmul.f32 %v2187, %v2170
        %v2190 = vmul.f32 %v2188, %v2175
        %v2191 = vmax.f32 %v2189, 0.0
        %v2192 = vmax.f32 %v2190, 0.0
        %2193 = vst [vmem:[%s520] sm:$0xff] %v2191
        %2194 = vst [vmem:[%s520 + $0x8] sm:$0xff] %v2192
        %2195 = vst.msk [vmem:[%s527] sm:$0xff] %vm546, %v2012
        %2196 = vst.msk [vmem:[%s527 + $0x8] sm:$0xff] %vm546, %v2013
        %s2197 = sand.u32 %s265, 1
        %s2198 = scalar_lea.sflag [#allocation4], %s2197
        %s2199 = sand.u32 %s265, 1
        %s2200 = smul.addr %s2199, 16
        %s2201 = scalar_lea.vmem [#allocation14], %s2200
        %s2202 = sand.u32 %s291, 1
        %s2203 = scalar_lea.sflag [#allocation16], %s2202
        %s2204 = sand.u32 %s291, 1
        %s2205 = smul.addr %s2204, 16
        %s2206 = scalar_lea.vmem [#allocation15], %s2205
        // Predicated region
        $region89: #{tpu_custom_call.1} parent=59 // pred_check
          %p2207 = pneg %p275
        $region90: #{tpu_custom_call.1} parent=59 // pred_check_branch
          %2209 = sbr.rel (%p2207) target = $region92
        $region91: #{tpu_custom_call.1} parent=59 // pred_region
          %s2211 = ssub.s32 256, 256
          %2212 = vsyncadd %s2198, %s2211
          %s2213 = smul.addr %s37, 2
          %s2214 = smul.addr %s2213, 128
          %s2215 = scalar_lea.hbm %s10, %s2214
          %s2216 = sshll.u32 %s2201, 4
          %s2217 = int_to_ptr.vmem [resolvable:$true] %s2216
          %2222 = dma.vmem_to_hbm [thread:$0]  %s2217, 256, %s2215, %s2198, 128, 128, 8
        $region92: #{tpu_custom_call.1} parent=59 // pred_fallthru
          _
        // Predicated region
        $region93: #{tpu_custom_call.1} parent=59 // pred_check
          %p2223 = pneg %p301
        $region94: #{tpu_custom_call.1} parent=59 // pred_check_branch
          %2225 = sbr.rel (%p2223) target = $region96
        $region95: #{tpu_custom_call.1} parent=59 // pred_region
          %s2227 = ssub.s32 256, 256
          %2228 = vsyncadd %s2203, %s2227
          %s2229 = smul.addr %s37, 2
          %s2230 = smul.addr %s2229, 128
          %s2231 = scalar_lea.hbm %s11, %s2230
          %s2232 = sshll.u32 %s2206, 4
          %s2233 = int_to_ptr.vmem [resolvable:$true] %s2232
          %2238 = dma.vmem_to_hbm [thread:$0]  %s2233, 256, %s2231, %s2203, 128, 128, 8
        $region96: #{tpu_custom_call.1} parent=59 // pred_fallthru
          _
      $region60: #{tpu_custom_call.1} parent=5 // pred_fallthru
        _
      %p2239 = scmp.le.s32.totalorder 2, %s32
      // Predicated region
      $region97: #{tpu_custom_call.1} parent=5 // pred_check
        %p2240 = pneg %p2239
      $region98: #{tpu_custom_call.1} parent=5 // pred_check_branch
        %2242 = sbr.rel (%p2240) target = $region100
      $region99: #{tpu_custom_call.1} parent=5 // pred_region
        %s2243 = ssub.s32 %s32, 2
        // Predicated region
        $region101: #{tpu_custom_call.1} parent=99 // pred_check
          %p2244 = pneg %p281
        $region102: #{tpu_custom_call.1} parent=99 // pred_check_branch
          %2246 = sbr.rel (%p2244) target = $region104
        $region103: #{tpu_custom_call.1} parent=99 // pred_region
          %s2247 = sand.u32 %s266, 1
          %s2248 = scalar_lea.sflag [#allocation4], %s2247
          %s2249 = sand.u32 %s266, 1
          %s2250 = smul.addr %s2249, 16
          %s2251 = scalar_lea.vmem [#allocation14], %s2250
          %2252 = dma.done %s2248, 256
        $region104: #{tpu_custom_call.1} parent=99 // pred_fallthru
          _
        // Predicated region
        $region105: #{tpu_custom_call.1} parent=99 // pred_check
          %p2253 = pneg %p307
        $region106: #{tpu_custom_call.1} parent=99 // pred_check_branch
          %2255 = sbr.rel (%p2253) target = $region108
        $region107: #{tpu_custom_call.1} parent=99 // pred_region
          %s2256 = sand.u32 %s292, 1
          %s2257 = scalar_lea.sflag [#allocation16], %s2256
          %s2258 = sand.u32 %s292, 1
          %s2259 = smul.addr %s2258, 16
          %s2260 = scalar_lea.vmem [#allocation15], %s2259
          %2261 = dma.done %s2257, 256
        $region108: #{tpu_custom_call.1} parent=99 // pred_fallthru
          _
      $region100: #{tpu_custom_call.1} parent=5 // pred_fallthru
        _
    $region6: #{tpu_custom_call.1} parent=1 // loop_footer
      %s36 = sadd.s32 1, %s32
    $region7: #{tpu_custom_call.1} parent=1 // loop_footer_branch
      %31 = sbr.rel target = $region3
    $region8: #{tpu_custom_call.1} parent=1 // loop_exit
      _
    %2262 = vsyncpa [#allocation3], 1
    %s2263 = scalar_lea.sflag [#allocation3], 1
    %2264 = vsyncpa %s2263, 1
    %2265 = vsyncpa [#allocation6], 1
    %s2266 = scalar_lea.sflag [#allocation6], 1
    %2267 = vsyncpa %s2266, 1
    %2268 = vsyncpa [#allocation9], 1
    %2269 = vsyncpa [#allocation12], 1
    %2270 = vsyncpa [#allocation4], 1
    %s2271 = scalar_lea.sflag [#allocation4], 1
    %2272 = vsyncpa %s2271, 1
    %2273 = vsyncpa [#allocation16], 1
    %s2274 = scalar_lea.sflag [#allocation16], 1
    %2275 = vsyncpa %s2274, 1

</llo_original>
